<compile_context>
chip_gen: v6e
topology: v6e:2x2x1
jax: 0.10.0
libtpu: 0.0.40
codegen_flags: <defaults>
</compile_context>

<pallas_src>
import functools

import jax
import jax.numpy as jnp
from jax.experimental import pallas as pl
from jax.experimental.pallas import tpu as pltpu


# --------------------------------------------------------------------------
# Lanczos log-Gamma folded into a single rational polynomial P(y)/Q(y).
# Evaluated with Horner (VALU mul/add) + ONE divide + 2 logs per call, instead
# of the naive 8 divides + 2 logs.  The ZINB kernel has no matmuls, so the
# binding VLIW slot is the single EUP slot -- this is the main optimization.
# --------------------------------------------------------------------------

_LANCZOS_G = 7.0
_LANCZOS_COEF = (
    0.99999999999980993, 676.5203681218851, -1259.1392167224028,
    771.32342877765313, -176.61502916214059, 12.507343278686905,
    -0.13857109526572012, 9.9843695780195716e-6, 1.5056327351493116e-7,
)


def _poly_mul(a, b):
    out = [0.0] * (len(a) + len(b) - 1)
    for i, ai in enumerate(a):
        for j, bj in enumerate(b):
            out[i + j] += ai * bj
    return out


def _build_lanczos_rational():
    """Fold c0 + sum_i c_i/(y+i) into P(y)/Q(y) (coefficients in float64)."""
    c = _LANCZOS_COEF
    q = [1.0]
    for i in range(1, 9):
        q = _poly_mul(q, [float(i), 1.0])              # Q(y) = prod (y+i)
    p = [c[0] * v for v in q]                          # c0 * Q(y)
    for i in range(1, 9):
        r = [1.0]
        for j in range(1, 9):
            if j != i:
                r = _poly_mul(r, [float(j), 1.0])      # prod_{j!=i} (y+j)
        r = r + [0.0]                                  # pad to degree 8
        for k in range(9):
            p[k] += c[i] * r[k]
    return tuple(p), tuple(q)


_LANCZOS_P, _LANCZOS_Q = _build_lanczos_rational()
_HALF_LOG_2PI = 0.9189385332046727


def _softplus(x):
    # numerically stable softplus using only exp / log / abs / max
    return jnp.maximum(x, 0.0) + jnp.log(1.0 + jnp.exp(-jnp.abs(x)))


def _lgamma_pos(z):
    """log Gamma(z) for z > 0 (rational Lanczos, 2 logs + 1 divide on EUP).

    # TODO(synk): Q(y) ~ y^8 overflows float32 for z > ~6e4; fine for typical
    # count magnitudes, revisit (Stirling branch) for very large counts.
    """
    y = z - 1.0
    p = jnp.full_like(y, _LANCZOS_P[8])
    q = jnp.full_like(y, _LANCZOS_Q[8])
    for k in range(7, -1, -1):               # Horner: pure VALU mul/add
        p = p * y + _LANCZOS_P[k]
        q = q * y + _LANCZOS_Q[k]
    s = p / q                                 # single divide
    t = y + _LANCZOS_G + 0.5
    return _HALF_LOG_2PI + (y + 0.5) * jnp.log(t) - t + jnp.log(s)


def _zinb_log_prob(x, mu, pi, theta, log_theta_eps, lgamma_theta):
    """scvi-tools ZeroInflatedNegativeBinomial.log_prob (elementwise)."""
    eps = 1e-8
    softplus_neg_pi = _softplus(-pi)
    log_theta_mu_eps = jnp.log(theta + mu + eps)
    pi_theta_log = -pi + theta * (log_theta_eps - log_theta_mu_eps)
    case_zero = _softplus(pi_theta_log) - softplus_neg_pi
    case_non_zero = (
        -softplus_neg_pi
        + pi_theta_log
        + x * (jnp.log(mu + eps) - log_theta_mu_eps)
        + _lgamma_pos(x + theta)
        - lgamma_theta
        - _lgamma_pos(x + 1.0)
    )
    return (jnp.where(x < eps, case_zero, 0.0)
            + jnp.where(x > eps, case_non_zero, 0.0))


# --------------------------------------------------------------------------
# Fused kernel: ZINB NLL (reduced over genes) + KL(l) + KL(z) + soft-target
# cross entropy + triplet-margin hinge, all per-sample.
#   grid = (batch tiles ["parallel" -> v7x megacore], gene tiles ["arbitrary"])
# --------------------------------------------------------------------------

def _orion_body(x, mu, pi, theta, log_theta_eps, lgamma_theta,
                qzm_ref, qzv_ref, qlm_ref, qlv_ref, llm_ref, llv_ref,
                ct_ref, oh_ref, pos_ref, neg_ref,
                loss1_ref, klz_ref, ce_ref, trip_ref, acc_ref,
                *, margin, trip_eps):
    g = pl.program_id(1)

    @pl.when(g == 0)
    def _init():
        acc_ref[...] = jnp.zeros_like(acc_ref)

    log_prob = _zinb_log_prob(x, mu, pi, theta, log_theta_eps, lgamma_theta)

    # Lane-wise partial accumulation: static 128-lane slices are vreg-aligned
    # (free), the adds are VALU; the cross-lane (XLU) reduce + 1-lane store
    # only happen once in the finalize step.
    acc_w = acc_ref.shape[-1]
    n_groups = log_prob.shape[-1] // acc_w
    partial = log_prob[:, 0:acc_w]
    for c in range(1, n_groups):
        partial = partial + log_prob[:, c * acc_w:(c + 1) * acc_w]
    acc_ref[...] += partial

    @pl.when(g == pl.num_programs(1) - 1)
    def _finalize():
        # ---- loss_1: ZINB negative log-likelihood + KL( q(l) || p(l) ) ----
        nll = -jnp.sum(acc_ref[...], axis=-1, keepdims=True)
        ql_m = qlm_ref[...]
        ql_v = qlv_ref[...]
        lm = llm_ref[...]
        lv = llv_ref[...]
        kl_l = (0.5 * jnp.log(lv / ql_v)
                + (ql_v + (ql_m - lm) ** 2) / (2.0 * lv) - 0.5)
        loss1_ref[...] = nll + jnp.sum(kl_l, axis=-1, keepdims=True)

        # ---- loss_2: KL( q(z) || N(0, 1) ) --------------------------------
        qz_m = qzm_ref[...]
        qz_v = qzv_ref[...]
        klz_ref[...] = jnp.sum(
            0.5 * (qz_v + qz_m * qz_m - jnp.log(qz_v) - 1.0),
            axis=-1, keepdims=True)

        # ---- loss_3: per-sample soft-target cross entropy (fused here so
        #      there is no separate micro pallas_call) ----------------------
        logits = ct_ref[...]
        m = jnp.max(logits, axis=-1, keepdims=True)
        zc = logits - m
        lse = jnp.log(jnp.sum(jnp.exp(zc), axis=-1, keepdims=True))
        ce_ref[...] = -jnp.sum(oh_ref[...] * (zc - lse), axis=-1, keepdims=True)

        # ---- loss_4: per-sample triplet hinge, summed over (pos, neg) pairs
        n_pairs = pos_ref.shape[0]
        hinge = jnp.zeros((qz_m.shape[0], 1), jnp.float32)
        for p in range(n_pairs):        # static unroll, n_pairs is tiny
            d_pos = jnp.sqrt(jnp.sum((qz_m - pos_ref[p] + trip_eps) ** 2,
                                     axis=-1, keepdims=True))
            d_neg = jnp.sqrt(jnp.sum((qz_m - neg_ref[p] + trip_eps) ** 2,
                                     axis=-1, keepdims=True))
            hinge = hinge + jnp.maximum(d_pos - d_neg + margin, 0.0)
        trip_ref[...] = hinge


def _orion_kernel_dense_theta(x_ref, rate_ref, drop_ref, theta_ref,
                              qzm_ref, qzv_ref, qlm_ref, qlv_ref, llm_ref, llv_ref,
                              ct_ref, oh_ref, pos_ref, neg_ref,
                              loss1_ref, klz_ref, ce_ref, trip_ref, acc_ref,
                              *, margin, trip_eps):
    theta = theta_ref[...]
    _orion_body(x_ref[...], rate_ref[...], drop_ref[...], theta,
                jnp.log(theta + 1e-8), _lgamma_pos(theta),
                qzm_ref, qzv_ref, qlm_ref, qlv_ref, llm_ref, llv_ref,
                ct_ref, oh_ref, pos_ref, neg_ref,
                loss1_ref, klz_ref, ce_ref, trip_ref, acc_ref,
                margin=margin, trip_eps=trip_eps)


def _orion_kernel_gene_theta(x_ref, rate_ref, drop_ref, theta_ref,
                             logth_ref, lgth_ref,
                             qzm_ref, qzv_ref, qlm_ref, qlv_ref, llm_ref, llv_ref,
                             ct_ref, oh_ref, pos_ref, neg_ref,
                             loss1_ref, klz_ref, ce_ref, trip_ref, acc_ref,
                             *, margin, trip_eps):
    # per-gene theta fast path: log(theta+eps) and lgamma(theta) were hoisted
    # out of the (batch x gene) loop and arrive as (1, gene_tile) rows.
    _orion_body(x_ref[...], rate_ref[...], drop_ref[...], theta_ref[...],
                logth_ref[...], lgth_ref[...],
                qzm_ref, qzv_ref, qlm_ref, qlv_ref, llm_ref, llv_ref,
                ct_ref, oh_ref, pos_ref, neg_ref,
                loss1_ref, klz_ref, ce_ref, trip_ref, acc_ref,
                margin=margin, trip_eps=trip_eps)


def _pick_tile(n, max_tile, quantum):
    """Largest tile <= max_tile that divides n (multiple of `quantum`), else n."""
    if n <= max_tile:
        return n
    t = (max_tile // quantum) * quantum
    while t >= quantum:
        if n % t == 0:
            return t
        t -= quantum
    return n


def fused_orion_losses(x, px_rate, px_r, px_dropout,
                       qz_m, qz_v, ql_m, ql_v, local_l_mean, local_l_var,
                       ctpred, onehot, pos_stack, neg_stack,
                       *, gene_tile=1024, batch_tile=256,
                       margin=1.0, trip_eps=1e-6):
    B, G = x.shape
    L = qz_m.shape[1]
    Ll = ql_m.shape[1]
    C = ctpred.shape[1]
    P = pos_stack.shape[0]

    per_gene_theta = (px_r.ndim == 1)

    bt = _pick_tile(B, batch_tile, 8)
    gt = _pick_tile(G, gene_tile, 128)

    # VMEM budgeting: double-buffered gene-tiled working set must stay well
    # under every generation's scoped limit (v5e scoped default 16 MiB,
    # v7x 64 MiB physical).  Shrink gene tile if needed, and raise the scoped
    # limit explicitly (safe on all generations: 32-48 MiB < physical VMEM).
    def _est_bytes(bt_, gt_):
        gene_elems = (3 * bt_ + (1 if per_gene_theta else bt_)) * gt_
        gene_elems += (2 * gt_) if per_gene_theta else 0
        small_elems = bt_ * (2 * L + 4 * Ll + 2 * C + 4) + 2 * P * bt_ * L
        return 4 * (2 * gene_elems + 2 * small_elems + bt_ * min(gt_, 128))

    budget = 10 * 2 ** 20
    while _est_bytes(bt, gt) > budget and gt % 256 == 0 and gt > 256:
        gt //= 2
    vmem_limit = int(min(48 * 2 ** 20, max(32 * 2 ** 20, 3 * _est_bytes(bt, gt))))

    acc_w = 128 if gt % 128 == 0 else gt
    grid = (B // bt, G // gt)

    gene_spec = pl.BlockSpec((bt, gt), lambda b, g: (b, g))
    row_spec = pl.BlockSpec((1, gt), lambda b, g: (0, g))
    lat_spec = pl.BlockSpec((bt, L), lambda b, g: (b, 0))
    lib_spec = pl.BlockSpec((bt, Ll), lambda b, g: (b, 0))
    cls_spec = pl.BlockSpec((bt, C), lambda b, g: (b, 0))
    pair_spec = pl.BlockSpec((P, bt, L), lambda b, g: (0, b, 0))
    out_spec = pl.BlockSpec((bt, 1), lambda b, g: (b, 0))

    if per_gene_theta:
        theta2d = px_r.reshape(1, G).astype(jnp.float32)
        # Hoist the per-gene transcendentals out of the kernel: O(G) work in
        # plain XLA instead of O(B*G) EUP work in the EUP-bound kernel.
        log_theta = jnp.log(theta2d + 1e-8)
        lgamma_theta = jax.lax.lgamma(theta2d)
        kernel = functools.partial(_orion_kernel_gene_theta,
                                   margin=margin, trip_eps=trip_eps)
        gene_inputs = (x, px_rate, px_dropout, theta2d, log_theta, lgamma_theta)
        gene_specs = [gene_spec, gene_spec, gene_spec, row_spec, row_spec, row_spec]
    else:
        kernel = functools.partial(_orion_kernel_dense_theta,
                                   margin=margin, trip_eps=trip_eps)
        gene_inputs = (x, px_rate, px_dropout, px_r)
        gene_specs = [gene_spec, gene_spec, gene_spec, gene_spec]

    loss1_ps, klz_ps, ce_ps, trip_ps = pl.pallas_call(
        kernel,
        grid=grid,
        in_specs=gene_specs + [lat_spec, lat_spec, lib_spec, lib_spec,
                               lib_spec, lib_spec, cls_spec, cls_spec,
                               pair_spec, pair_spec],
        out_specs=(out_spec, out_spec, out_spec, out_spec),
        out_shape=(jax.ShapeDtypeStruct((B, 1), jnp.float32),) * 4,
        scratch_shapes=[pltpu.VMEM((bt, acc_w), jnp.float32)],
        compiler_params=pltpu.CompilerParams(
            dimension_semantics=("parallel", "arbitrary"),
            vmem_limit_bytes=vmem_limit),
    )(*gene_inputs, qz_m, qz_v, ql_m, ql_v, local_l_mean, local_l_var,
      ctpred, onehot, pos_stack, neg_stack)

    return loss1_ps[:, 0], klz_ps[:, 0], ce_ps[:, 0], trip_ps[:, 0]


# --------------------------------------------------------------------------
# OrionLoss.forward (glue in plain JAX; all hot element-wise work is fused in
# the single Pallas kernel above)
# --------------------------------------------------------------------------

def orion_loss_forward(prediction_dict, parameters_dict, model_params):
    pred = dict(prediction_dict)
    pred.update(parameters_dict)

    if pred['input_onctensor'].shape[0] == 0:
        raise ZeroDivisionError(
            'loss cannot be normalized by the number of samples if `prediction` '
            'is of size 0.')

    # TODO(synk): weight_sample_loss / use_generative_sampling / num_classes==1
    #             regression head / 'nb','poisson','gaussian' likelihoods are
    #             not implemented (defaults only).

    x = pred['input_onctensor']
    B = x.shape[0]
    L = pred['qz_m'].shape[1]

    predict_classes = bool(pred['predict_classes'])
    if predict_classes:
        ctpred = pred['ctpred']
        onehot = pred['input_onehottensor']
    else:
        ctpred = jnp.zeros((B, 1), jnp.float32)
        onehot = jnp.zeros((B, 1), jnp.float32)

    pos_list = pred['pos_qz_m']
    use_triplet = bool(pred['use_triplet_loss']) and len(pos_list) > 0
    if use_triplet:
        pos_stack = jnp.stack(pos_list, axis=0)
        neg_stack = jnp.stack(pred['neg_qz_m'], axis=0)
    else:
        pos_stack = jnp.zeros((1, B, L), jnp.float32)
        neg_stack = jnp.zeros((1, B, L), jnp.float32)

    loss1_ps, klz_ps, ce_ps, trip_ps = fused_orion_losses(
        x, pred['px_rate'], pred['px_r'], pred['px_dropout'],
        pred['qz_m'], pred['qz_v'], pred['ql_m'], pred['ql_v'],
        pred['local_l_mean'], pred['local_l_var'],
        ctpred, onehot, pos_stack, neg_stack)

    loss_1 = jnp.mean(loss1_ps)          # ZINB NLL + KL(l), batch-mean
    loss_2 = jnp.mean(klz_ps)            # KL(z), batch-mean
    loss_5 = jnp.zeros((1,), jnp.float32)   # add_regression_reconst=False default

    loss_3 = jnp.mean(ce_ps) if predict_classes else jnp.float32(0.0)
    loss_4 = (jnp.mean(trip_ps) / float(len(pos_list))) if use_triplet \
        else jnp.float32(0.0)

    # ---- total loss ---------------------------------------------------------
    loss = loss_1 * 0.0
    losses = [loss_1, loss_2, loss_3, loss_4, loss_5]
    for i, each_loss in enumerate(losses):
        if pred['loss_scalers'][i] > 0:
            # squeeze keeps the total a scalar even for the (1,)-shaped loss_5
            loss = loss + jnp.squeeze(each_loss) / jnp.float32(pred['loss_scalers'][i])

    # ---- L1/L2 regularization of the (synthetic) model parameters ----------
    # (parameter introspection is setup/glue: norms are done in plain JAX)
    l1, l2 = pred.get('l1'), pred.get('l2')
    if l1 is not None or l2 is not None:
        oncrna_p, l_p, dec_p = model_params
        if l1 is not None:
            loss = loss + l1 * (jnp.sum(jnp.abs(oncrna_p))
                                + jnp.sum(jnp.abs(l_p))
                                + jnp.sum(jnp.abs(dec_p)))
        if l2 is not None:
            loss = loss + l2 * (jnp.sqrt(jnp.sum(oncrna_p ** 2))
                                + jnp.sqrt(jnp.sum(l_p ** 2))
                                + jnp.sqrt(jnp.sum(dec_p ** 2)))

    return loss_1, loss_2, loss_3, loss_4, loss, loss_5


# --------------------------------------------------------------------------
# demo
# --------------------------------------------------------------------------

if __name__ == "__main__":
    B, G, L, C, P = 8, 256, 32, 10, 2   # batch, n_input(genes), n_latent, classes, triplet pairs
    key = jax.random.PRNGKey(0)
    keys = jax.random.split(key, 20)

    x = jax.random.poisson(keys[0], 2.0, (B, G)).astype(jnp.float32)
    px_rate = jax.nn.softplus(jax.random.normal(keys[1], (B, G))) + 0.1
    px_r_gene = jax.nn.softplus(jax.random.normal(keys[2], (G,))) + 0.1
    px_r = jnp.tile(px_r_gene[None, :], (B, 1))          # (B, G) as in the spec
    px_dropout = jax.random.normal(keys[3], (B, G))
    qz_m = jax.random.normal(keys[4], (B, L))
    qz_v = jax.nn.softplus(jax.random.normal(keys[5], (B, L))) + 0.1
    ql_m = jax.random.normal(keys[6], (B, 1)) + 3.0
    ql_v = jax.nn.softplus(jax.random.normal(keys[7], (B, 1))) + 0.1
    local_l_mean = jax.random.normal(keys[8], (B, 1)) + 3.0
    local_l_var = jnp.full((B, 1), 0.5, jnp.float32)
    ctpred = jax.random.normal(keys[9], (B, C))
    labels = jax.random.randint(keys[10], (B,), 0, C)
    onehot = jax.nn.one_hot(labels, C, dtype=jnp.float32)
    pos_qz_m = [jax.random.normal(keys[11 + i], (B, L)) for i in range(P)]
    neg_qz_m = [jax.random.normal(keys[13 + i], (B, L)) for i in range(P)]
    x_hat = jax.random.normal(keys[15], (B, G))

    # deterministic synthetic "model" parameters:
    # (data-encoder, library-encoder, decoder) flattened parameter vectors
    oncrna_params = 0.05 * jax.random.normal(keys[16], (G * 64 + 64,))
    l_params = 0.05 * jax.random.normal(keys[17], (G * 16 + 16,))
    decoder_params = 0.05 * jax.random.normal(keys[18], (64 * G + G,))
    model_params = (oncrna_params, l_params, decoder_params)

    prediction_dict = {
        'input_onctensor': x,
        'px_rate': px_rate, 'px_r': px_r, 'px_dropout': px_dropout,
        'qz_m': qz_m, 'qz_v': qz_v,
        'ql_m': ql_m, 'ql_v': ql_v,
        'local_l_mean': local_l_mean, 'local_l_var': local_l_var,
        'x_hat': x_hat,
        'ctpred': ctpred,
        'input_onehottensor': onehot,
        'use_generative_sampling': False,
        'predict_classes': True,
        'num_classes': C,
        'use_triplet_loss': True,
        'pos_qz_m': pos_qz_m,
        'neg_qz_m': neg_qz_m,
        'loss_scalers': [1.0, 1.0, 1.0, 1.0, 0.0],
        'l1': 1e-4,
        'l2': 1e-3,
    }
    parameters_dict = {'sample_loss_scaler': jnp.ones((B,), jnp.float32)}

    # dense-theta path (px_r shaped (B, G) as in the torch docstring)
    outs_dense = jax.block_until_ready(
        orion_loss_forward(prediction_dict, parameters_dict, model_params))

    # per-gene theta fast path (px_r shaped (G,)) — should agree numerically
    pred_gene = dict(prediction_dict)
    pred_gene['px_r'] = px_r_gene
    outs_gene = jax.block_until_ready(
        orion_loss_forward(pred_gene, parameters_dict, model_params))

    names = ["loss_1", "loss_2", "loss_3", "loss_4", "loss", "loss_5"]
    for name, a, b in zip(names, outs_dense, outs_gene):
        assert bool(jnp.allclose(a, b, rtol=2e-3, atol=2e-3)), \
            f"mismatch in {name}: {a} vs {b}"

    print("KERNEL_OK")
</pallas_src>

<mosaic_0001>
module attributes {stable_mosaic.version = 11 : i64} {
  func.func @_orion_kernel_dense_theta(%arg0: i32, %arg1: i32, %arg2: memref<8x256xf32, #tpu.memory_space<vmem>>, %arg3: memref<8x256xf32, #tpu.memory_space<vmem>>, %arg4: memref<8x256xf32, #tpu.memory_space<vmem>>, %arg5: memref<8x256xf32, #tpu.memory_space<vmem>>, %arg6: memref<8x32xf32, #tpu.memory_space<vmem>>, %arg7: memref<8x32xf32, #tpu.memory_space<vmem>>, %arg8: memref<8x1xf32, #tpu.memory_space<vmem>>, %arg9: memref<8x1xf32, #tpu.memory_space<vmem>>, %arg10: memref<8x1xf32, #tpu.memory_space<vmem>>, %arg11: memref<8x1xf32, #tpu.memory_space<vmem>>, %arg12: memref<8x10xf32, #tpu.memory_space<vmem>>, %arg13: memref<8x10xf32, #tpu.memory_space<vmem>>, %arg14: memref<2x8x32xf32, #tpu.memory_space<vmem>>, %arg15: memref<2x8x32xf32, #tpu.memory_space<vmem>>, %arg16: memref<8x1xf32, #tpu.memory_space<vmem>>, %arg17: memref<8x1xf32, #tpu.memory_space<vmem>>, %arg18: memref<8x1xf32, #tpu.memory_space<vmem>>, %arg19: memref<8x1xf32, #tpu.memory_space<vmem>>, %arg20: memref<8x128xf32, #tpu.memory_space<vmem>>) attributes {dimension_semantics = [#tpu.dimension_semantics<parallel>, #tpu.dimension_semantics<arbitrary>], iteration_bounds = array<i64: 1, 1>, scalar_prefetch = 0 : i64, scratch_operands = 1 : i64, tpu.core_type = #tpu.core_type<tc>, window_params = [{transform_indices = @transform_0, window_bounds = array<i64: 8, 256>}, {transform_indices = @transform_1, window_bounds = array<i64: 8, 256>}, {transform_indices = @transform_2, window_bounds = array<i64: 8, 256>}, {transform_indices = @transform_3, window_bounds = array<i64: 8, 256>}, {transform_indices = @transform_4, window_bounds = array<i64: 8, 32>}, {transform_indices = @transform_5, window_bounds = array<i64: 8, 32>}, {transform_indices = @transform_6, window_bounds = array<i64: 8, 1>}, {transform_indices = @transform_7, window_bounds = array<i64: 8, 1>}, {transform_indices = @transform_8, window_bounds = array<i64: 8, 1>}, {transform_indices = @transform_9, window_bounds = array<i64: 8, 1>}, {transform_indices = @transform_10, window_bounds = array<i64: 8, 10>}, {transform_indices = @transform_11, window_bounds = array<i64: 8, 10>}, {transform_indices = @transform_12, window_bounds = array<i64: 2, 8, 32>}, {transform_indices = @transform_13, window_bounds = array<i64: 2, 8, 32>}, {transform_indices = @transform_14, window_bounds = array<i64: 8, 1>}, {transform_indices = @transform_15, window_bounds = array<i64: 8, 1>}, {transform_indices = @transform_16, window_bounds = array<i64: 8, 1>}, {transform_indices = @transform_17, window_bounds = array<i64: 8, 1>}]} {
    %c0 = arith.constant 0 : index
    %c0_0 = arith.constant 0 : index
    %0 = vector.load %arg5[%c0, %c0_0] : memref<8x256xf32, #tpu.memory_space<vmem>>, vector<8x256xf32>
    %c0_1 = arith.constant 0 : index
    %c0_2 = arith.constant 0 : index
    %1 = vector.load %arg2[%c0_1, %c0_2] : memref<8x256xf32, #tpu.memory_space<vmem>>, vector<8x256xf32>
    %c0_3 = arith.constant 0 : index
    %c0_4 = arith.constant 0 : index
    %2 = vector.load %arg3[%c0_3, %c0_4] : memref<8x256xf32, #tpu.memory_space<vmem>>, vector<8x256xf32>
    %c0_5 = arith.constant 0 : index
    %c0_6 = arith.constant 0 : index
    %3 = vector.load %arg4[%c0_5, %c0_6] : memref<8x256xf32, #tpu.memory_space<vmem>>, vector<8x256xf32>
    %cst = arith.constant 9.99999993E-9 : f32
    %4 = vector.broadcast %cst : f32 to vector<8x256xf32>
    %5 = arith.addf %0, %4 : vector<8x256xf32>
    %6 = math.log %5 : vector<8x256xf32>
    %cst_7 = arith.constant 1.000000e+00 : f32
    %7 = vector.broadcast %cst_7 : f32 to vector<8x256xf32>
    %8 = arith.subf %0, %7 : vector<8x256xf32>
    %cst_8 = arith.constant 1.000000e+00 : f32
    %9 = vector.broadcast %cst_8 : f32 to vector<8x256xf32>
    %cst_9 = arith.constant 1.000000e+00 : f32
    %10 = vector.broadcast %cst_9 : f32 to vector<8x256xf32>
    %11 = arith.mulf %9, %8 : vector<8x256xf32>
    %cst_10 = arith.constant 60.4583321 : f32
    %12 = vector.broadcast %cst_10 : f32 to vector<8x256xf32>
    %13 = arith.addf %11, %12 : vector<8x256xf32>
    %14 = arith.mulf %10, %8 : vector<8x256xf32>
    %cst_11 = arith.constant 3.600000e+01 : f32
    %15 = vector.broadcast %cst_11 : f32 to vector<8x256xf32>
    %16 = arith.addf %14, %15 : vector<8x256xf32>
    %17 = arith.mulf %13, %8 : vector<8x256xf32>
    %cst_12 = arith.constant 1599.04248 : f32
    %18 = vector.broadcast %cst_12 : f32 to vector<8x256xf32>
    %19 = arith.addf %17, %18 : vector<8x256xf32>
    %20 = arith.mulf %16, %8 : vector<8x256xf32>
    %cst_13 = arith.constant 5.460000e+02 : f32
    %21 = vector.broadcast %cst_13 : f32 to vector<8x256xf32>
    %22 = arith.addf %20, %21 : vector<8x256xf32>
    %23 = arith.mulf %19, %8 : vector<8x256xf32>
    %cst_14 = arith.constant 24165.5098 : f32
    %24 = vector.broadcast %cst_14 : f32 to vector<8x256xf32>
    %25 = arith.addf %23, %24 : vector<8x256xf32>
    %26 = arith.mulf %22, %8 : vector<8x256xf32>
    %cst_15 = arith.constant 4.536000e+03 : f32
    %27 = vector.broadcast %cst_15 : f32 to vector<8x256xf32>
    %28 = arith.addf %26, %27 : vector<8x256xf32>
    %29 = arith.mulf %25, %8 : vector<8x256xf32>
    %cst_16 = arith.constant 228235.219 : f32
    %30 = vector.broadcast %cst_16 : f32 to vector<8x256xf32>
    %31 = arith.addf %29, %30 : vector<8x256xf32>
    %32 = arith.mulf %28, %8 : vector<8x256xf32>
    %cst_17 = arith.constant 2.244900e+04 : f32
    %33 = vector.broadcast %cst_17 : f32 to vector<8x256xf32>
    %34 = arith.addf %32, %33 : vector<8x256xf32>
    %35 = arith.mulf %31, %8 : vector<8x256xf32>
    %cst_18 = arith.constant 1379496.25 : f32
    %36 = vector.broadcast %cst_18 : f32 to vector<8x256xf32>
    %37 = arith.addf %35, %36 : vector<8x256xf32>
    %38 = arith.mulf %34, %8 : vector<8x256xf32>
    %cst_19 = arith.constant 6.728400e+04 : f32
    %39 = vector.broadcast %cst_19 : f32 to vector<8x256xf32>
    %40 = arith.addf %38, %39 : vector<8x256xf32>
    %41 = arith.mulf %37, %8 : vector<8x256xf32>
    %cst_20 = arith.constant 0x4A9F05EA : f32
    %42 = vector.broadcast %cst_20 : f32 to vector<8x256xf32>
    %43 = arith.addf %41, %42 : vector<8x256xf32>
    %44 = arith.mulf %40, %8 : vector<8x256xf32>
    %cst_21 = arith.constant 1.181240e+05 : f32
    %45 = vector.broadcast %cst_21 : f32 to vector<8x256xf32>
    %46 = arith.addf %44, %45 : vector<8x256xf32>
    %47 = arith.mulf %43, %8 : vector<8x256xf32>
    %cst_22 = arith.constant 0x4B2B9D51 : f32
    %48 = vector.broadcast %cst_22 : f32 to vector<8x256xf32>
    %49 = arith.addf %47, %48 : vector<8x256xf32>
    %50 = arith.mulf %46, %8 : vector<8x256xf32>
    %cst_23 = arith.constant 1.095840e+05 : f32
    %51 = vector.broadcast %cst_23 : f32 to vector<8x256xf32>
    %52 = arith.addf %50, %51 : vector<8x256xf32>
    %53 = arith.mulf %49, %8 : vector<8x256xf32>
    %cst_24 = arith.constant 0x4B220ADA : f32
    %54 = vector.broadcast %cst_24 : f32 to vector<8x256xf32>
    %55 = arith.addf %53, %54 : vector<8x256xf32>
    %56 = arith.mulf %52, %8 : vector<8x256xf32>
    %cst_25 = arith.constant 4.032000e+04 : f32
    %57 = vector.broadcast %cst_25 : f32 to vector<8x256xf32>
    %58 = arith.addf %56, %57 : vector<8x256xf32>
    %59 = arith.divf %55, %58 : vector<8x256xf32>
    %cst_26 = arith.constant 7.000000e+00 : f32
    %60 = vector.broadcast %cst_26 : f32 to vector<8x256xf32>
    %61 = arith.addf %8, %60 : vector<8x256xf32>
    %cst_27 = arith.constant 5.000000e-01 : f32
    %62 = vector.broadcast %cst_27 : f32 to vector<8x256xf32>
    %63 = arith.addf %61, %62 : vector<8x256xf32>
    %cst_28 = arith.constant 5.000000e-01 : f32
    %64 = vector.broadcast %cst_28 : f32 to vector<8x256xf32>
    %65 = arith.addf %8, %64 : vector<8x256xf32>
    %66 = math.log %63 : vector<8x256xf32>
    %67 = arith.mulf %65, %66 : vector<8x256xf32>
    %cst_29 = arith.constant 0.918938517 : f32
    %68 = vector.broadcast %cst_29 : f32 to vector<8x256xf32>
    %69 = arith.addf %68, %67 : vector<8x256xf32>
    %70 = arith.subf %69, %63 : vector<8x256xf32>
    %71 = math.log %59 : vector<8x256xf32>
    %72 = arith.addf %70, %71 : vector<8x256xf32>
    %c0_i32 = arith.constant 0 : i32
    %73 = arith.cmpi eq, %arg1, %c0_i32 : i32
    %74 = arith.extui %73 : i1 to i32
    %c0_i32_30 = arith.constant 0 : i32
    %75 = arith.cmpi ne, %74, %c0_i32_30 : i32
    scf.if %75 {
      %cst_99 = arith.constant 0.000000e+00 : f32
      %273 = vector.broadcast %cst_99 : f32 to vector<8x128xf32>
      %c0_100 = arith.constant 0 : index
      %c0_101 = arith.constant 0 : index
      %274 = vector.load %arg20[%c0_100, %c0_101] : memref<8x128xf32, #tpu.memory_space<vmem>>, vector<8x128xf32>
      tpu.vector_store %arg20[%c0_100, %c0_101], %273 {strides = array<i32>} : memref<8x128xf32, #tpu.memory_space<vmem>>, vector<8x128xf32>,
    } else {
    }
    %cst_31 = arith.constant 0.000000e+00 : f32
    %76 = vector.broadcast %cst_31 : f32 to vector<8x256xf32>
    %77 = arith.subf %76, %3 : vector<8x256xf32>
    %cst_32 = arith.constant 0.000000e+00 : f32
    %78 = vector.broadcast %cst_32 : f32 to vector<8x256xf32>
    %79 = arith.maximumf %77, %78 : vector<8x256xf32>
    %80 = math.absf %77 : vector<8x256xf32>
    %cst_33 = arith.constant 0.000000e+00 : f32
    %81 = vector.broadcast %cst_33 : f32 to vector<8x256xf32>
    %82 = arith.subf %81, %80 : vector<8x256xf32>
    %83 = math.exp %82 : vector<8x256xf32>
    %cst_34 = arith.constant 1.000000e+00 : f32
    %84 = vector.broadcast %cst_34 : f32 to vector<8x256xf32>
    %85 = arith.addf %84, %83 : vector<8x256xf32>
    %86 = math.log %85 : vector<8x256xf32>
    %87 = arith.addf %79, %86 : vector<8x256xf32>
    %88 = arith.addf %0, %2 : vector<8x256xf32>
    %cst_35 = arith.constant 9.99999993E-9 : f32
    %89 = vector.broadcast %cst_35 : f32 to vector<8x256xf32>
    %90 = arith.addf %88, %89 : vector<8x256xf32>
    %91 = math.log %90 : vector<8x256xf32>
    %cst_36 = arith.constant 0.000000e+00 : f32
    %92 = vector.broadcast %cst_36 : f32 to vector<8x256xf32>
    %93 = arith.subf %92, %3 : vector<8x256xf32>
    %94 = arith.subf %6, %91 : vector<8x256xf32>
    %95 = arith.mulf %0, %94 : vector<8x256xf32>
    %96 = arith.addf %93, %95 : vector<8x256xf32>
    %cst_37 = arith.constant 0.000000e+00 : f32
    %97 = vector.broadcast %cst_37 : f32 to vector<8x256xf32>
    %98 = arith.maximumf %96, %97 : vector<8x256xf32>
    %99 = math.absf %96 : vector<8x256xf32>
    %cst_38 = arith.constant 0.000000e+00 : f32
    %100 = vector.broadcast %cst_38 : f32 to vector<8x256xf32>
    %101 = arith.subf %100, %99 : vector<8x256xf32>
    %102 = math.exp %101 : vector<8x256xf32>
    %cst_39 = arith.constant 1.000000e+00 : f32
    %103 = vector.broadcast %cst_39 : f32 to vector<8x256xf32>
    %104 = arith.addf %103, %102 : vector<8x256xf32>
    %105 = math.log %104 : vector<8x256xf32>
    %106 = arith.addf %98, %105 : vector<8x256xf32>
    %107 = arith.subf %106, %87 : vector<8x256xf32>
    %cst_40 = arith.constant 0.000000e+00 : f32
    %108 = vector.broadcast %cst_40 : f32 to vector<8x256xf32>
    %109 = arith.subf %108, %87 : vector<8x256xf32>
    %110 = arith.addf %109, %96 : vector<8x256xf32>
    %cst_41 = arith.constant 9.99999993E-9 : f32
    %111 = vector.broadcast %cst_41 : f32 to vector<8x256xf32>
    %112 = arith.addf %2, %111 : vector<8x256xf32>
    %113 = math.log %112 : vector<8x256xf32>
    %114 = arith.subf %113, %91 : vector<8x256xf32>
    %115 = arith.mulf %1, %114 : vector<8x256xf32>
    %116 = arith.addf %110, %115 : vector<8x256xf32>
    %117 = arith.addf %1, %0 : vector<8x256xf32>
    %cst_42 = arith.constant 1.000000e+00 : f32
    %118 = vector.broadcast %cst_42 : f32 to vector<8x256xf32>
    %119 = arith.subf %117, %118 : vector<8x256xf32>
    %cst_43 = arith.constant 1.000000e+00 : f32
    %120 = vector.broadcast %cst_43 : f32 to vector<8x256xf32>
    %cst_44 = arith.constant 1.000000e+00 : f32
    %121 = vector.broadcast %cst_44 : f32 to vector<8x256xf32>
    %122 = arith.mulf %120, %119 : vector<8x256xf32>
    %cst_45 = arith.constant 60.4583321 : f32
    %123 = vector.broadcast %cst_45 : f32 to vector<8x256xf32>
    %124 = arith.addf %122, %123 : vector<8x256xf32>
    %125 = arith.mulf %121, %119 : vector<8x256xf32>
    %cst_46 = arith.constant 3.600000e+01 : f32
    %126 = vector.broadcast %cst_46 : f32 to vector<8x256xf32>
    %127 = arith.addf %125, %126 : vector<8x256xf32>
    %128 = arith.mulf %124, %119 : vector<8x256xf32>
    %cst_47 = arith.constant 1599.04248 : f32
    %129 = vector.broadcast %cst_47 : f32 to vector<8x256xf32>
    %130 = arith.addf %128, %129 : vector<8x256xf32>
    %131 = arith.mulf %127, %119 : vector<8x256xf32>
    %cst_48 = arith.constant 5.460000e+02 : f32
    %132 = vector.broadcast %cst_48 : f32 to vector<8x256xf32>
    %133 = arith.addf %131, %132 : vector<8x256xf32>
    %134 = arith.mulf %130, %119 : vector<8x256xf32>
    %cst_49 = arith.constant 24165.5098 : f32
    %135 = vector.broadcast %cst_49 : f32 to vector<8x256xf32>
    %136 = arith.addf %134, %135 : vector<8x256xf32>
    %137 = arith.mulf %133, %119 : vector<8x256xf32>
    %cst_50 = arith.constant 4.536000e+03 : f32
    %138 = vector.broadcast %cst_50 : f32 to vector<8x256xf32>
    %139 = arith.addf %137, %138 : vector<8x256xf32>
    %140 = arith.mulf %136, %119 : vector<8x256xf32>
    %cst_51 = arith.constant 228235.219 : f32
    %141 = vector.broadcast %cst_51 : f32 to vector<8x256xf32>
    %142 = arith.addf %140, %141 : vector<8x256xf32>
    %143 = arith.mulf %139, %119 : vector<8x256xf32>
    %cst_52 = arith.constant 2.244900e+04 : f32
    %144 = vector.broadcast %cst_52 : f32 to vector<8x256xf32>
    %145 = arith.addf %143, %144 : vector<8x256xf32>
    %146 = arith.mulf %142, %119 : vector<8x256xf32>
    %cst_53 = arith.constant 1379496.25 : f32
    %147 = vector.broadcast %cst_53 : f32 to vector<8x256xf32>
    %148 = arith.addf %146, %147 : vector<8x256xf32>
    %149 = arith.mulf %145, %119 : vector<8x256xf32>
    %cst_54 = arith.constant 6.728400e+04 : f32
    %150 = vector.broadcast %cst_54 : f32 to vector<8x256xf32>
    %151 = arith.addf %149, %150 : vector<8x256xf32>
    %152 = arith.mulf %148, %119 : vector<8x256xf32>
    %cst_55 = arith.constant 0x4A9F05EA : f32
    %153 = vector.broadcast %cst_55 : f32 to vector<8x256xf32>
    %154 = arith.addf %152, %153 : vector<8x256xf32>
    %155 = arith.mulf %151, %119 : vector<8x256xf32>
    %cst_56 = arith.constant 1.181240e+05 : f32
    %156 = vector.broadcast %cst_56 : f32 to vector<8x256xf32>
    %157 = arith.addf %155, %156 : vector<8x256xf32>
    %158 = arith.mulf %154, %119 : vector<8x256xf32>
    %cst_57 = arith.constant 0x4B2B9D51 : f32
    %159 = vector.broadcast %cst_57 : f32 to vector<8x256xf32>
    %160 = arith.addf %158, %159 : vector<8x256xf32>
    %161 = arith.mulf %157, %119 : vector<8x256xf32>
    %cst_58 = arith.constant 1.095840e+05 : f32
    %162 = vector.broadcast %cst_58 : f32 to vector<8x256xf32>
    %163 = arith.addf %161, %162 : vector<8x256xf32>
    %164 = arith.mulf %160, %119 : vector<8x256xf32>
    %cst_59 = arith.constant 0x4B220ADA : f32
    %165 = vector.broadcast %cst_59 : f32 to vector<8x256xf32>
    %166 = arith.addf %164, %165 : vector<8x256xf32>
    %167 = arith.mulf %163, %119 : vector<8x256xf32>
    %cst_60 = arith.constant 4.032000e+04 : f32
    %168 = vector.broadcast %cst_60 : f32 to vector<8x256xf32>
    %169 = arith.addf %167, %168 : vector<8x256xf32>
    %170 = arith.divf %166, %169 : vector<8x256xf32>
    %cst_61 = arith.constant 7.000000e+00 : f32
    %171 = vector.broadcast %cst_61 : f32 to vector<8x256xf32>
    %172 = arith.addf %119, %171 : vector<8x256xf32>
    %cst_62 = arith.constant 5.000000e-01 : f32
    %173 = vector.broadcast %cst_62 : f32 to vector<8x256xf32>
    %174 = arith.addf %172, %173 : vector<8x256xf32>
    %cst_63 = arith.constant 5.000000e-01 : f32
    %175 = vector.broadcast %cst_63 : f32 to vector<8x256xf32>
    %176 = arith.addf %119, %175 : vector<8x256xf32>
    %177 = math.log %174 : vector<8x256xf32>
    %178 = arith.mulf %176, %177 : vector<8x256xf32>
    %cst_64 = arith.constant 0.918938517 : f32
    %179 = vector.broadcast %cst_64 : f32 to vector<8x256xf32>
    %180 = arith.addf %179, %178 : vector<8x256xf32>
    %181 = arith.subf %180, %174 : vector<8x256xf32>
    %182 = math.log %170 : vector<8x256xf32>
    %183 = arith.addf %181, %182 : vector<8x256xf32>
    %184 = arith.addf %116, %183 : vector<8x256xf32>
    %185 = arith.subf %184, %72 : vector<8x256xf32>
    %cst_65 = arith.constant 1.000000e+00 : f32
    %186 = vector.broadcast %cst_65 : f32 to vector<8x256xf32>
    %187 = arith.addf %1, %186 : vector<8x256xf32>
    %cst_66 = arith.constant 1.000000e+00 : f32
    %188 = vector.broadcast %cst_66 : f32 to vector<8x256xf32>
    %189 = arith.subf %187, %188 : vector<8x256xf32>
    %cst_67 = arith.constant 1.000000e+00 : f32
    %190 = vector.broadcast %cst_67 : f32 to vector<8x256xf32>
    %cst_68 = arith.constant 1.000000e+00 : f32
    %191 = vector.broadcast %cst_68 : f32 to vector<8x256xf32>
    %192 = arith.mulf %190, %189 : vector<8x256xf32>
    %cst_69 = arith.constant 60.4583321 : f32
    %193 = vector.broadcast %cst_69 : f32 to vector<8x256xf32>
    %194 = arith.addf %192, %193 : vector<8x256xf32>
    %195 = arith.mulf %191, %189 : vector<8x256xf32>
    %cst_70 = arith.constant 3.600000e+01 : f32
    %196 = vector.broadcast %cst_70 : f32 to vector<8x256xf32>
    %197 = arith.addf %195, %196 : vector<8x256xf32>
    %198 = arith.mulf %194, %189 : vector<8x256xf32>
    %cst_71 = arith.constant 1599.04248 : f32
    %199 = vector.broadcast %cst_71 : f32 to vector<8x256xf32>
    %200 = arith.addf %198, %199 : vector<8x256xf32>
    %201 = arith.mulf %197, %189 : vector<8x256xf32>
    %cst_72 = arith.constant 5.460000e+02 : f32
    %202 = vector.broadcast %cst_72 : f32 to vector<8x256xf32>
    %203 = arith.addf %201, %202 : vector<8x256xf32>
    %204 = arith.mulf %200, %189 : vector<8x256xf32>
    %cst_73 = arith.constant 24165.5098 : f32
    %205 = vector.broadcast %cst_73 : f32 to vector<8x256xf32>
    %206 = arith.addf %204, %205 : vector<8x256xf32>
    %207 = arith.mulf %203, %189 : vector<8x256xf32>
    %cst_74 = arith.constant 4.536000e+03 : f32
    %208 = vector.broadcast %cst_74 : f32 to vector<8x256xf32>
    %209 = arith.addf %207, %208 : vector<8x256xf32>
    %210 = arith.mulf %206, %189 : vector<8x256xf32>
    %cst_75 = arith.constant 228235.219 : f32
    %211 = vector.broadcast %cst_75 : f32 to vector<8x256xf32>
    %212 = arith.addf %210, %211 : vector<8x256xf32>
    %213 = arith.mulf %209, %189 : vector<8x256xf32>
    %cst_76 = arith.constant 2.244900e+04 : f32
    %214 = vector.broadcast %cst_76 : f32 to vector<8x256xf32>
    %215 = arith.addf %213, %214 : vector<8x256xf32>
    %216 = arith.mulf %212, %189 : vector<8x256xf32>
    %cst_77 = arith.constant 1379496.25 : f32
    %217 = vector.broadcast %cst_77 : f32 to vector<8x256xf32>
    %218 = arith.addf %216, %217 : vector<8x256xf32>
    %219 = arith.mulf %215, %189 : vector<8x256xf32>
    %cst_78 = arith.constant 6.728400e+04 : f32
    %220 = vector.broadcast %cst_78 : f32 to vector<8x256xf32>
    %221 = arith.addf %219, %220 : vector<8x256xf32>
    %222 = arith.mulf %218, %189 : vector<8x256xf32>
    %cst_79 = arith.constant 0x4A9F05EA : f32
    %223 = vector.broadcast %cst_79 : f32 to vector<8x256xf32>
    %224 = arith.addf %222, %223 : vector<8x256xf32>
    %225 = arith.mulf %221, %189 : vector<8x256xf32>
    %cst_80 = arith.constant 1.181240e+05 : f32
    %226 = vector.broadcast %cst_80 : f32 to vector<8x256xf32>
    %227 = arith.addf %225, %226 : vector<8x256xf32>
    %228 = arith.mulf %224, %189 : vector<8x256xf32>
    %cst_81 = arith.constant 0x4B2B9D51 : f32
    %229 = vector.broadcast %cst_81 : f32 to vector<8x256xf32>
    %230 = arith.addf %228, %229 : vector<8x256xf32>
    %231 = arith.mulf %227, %189 : vector<8x256xf32>
    %cst_82 = arith.constant 1.095840e+05 : f32
    %232 = vector.broadcast %cst_82 : f32 to vector<8x256xf32>
    %233 = arith.addf %231, %232 : vector<8x256xf32>
    %234 = arith.mulf %230, %189 : vector<8x256xf32>
    %cst_83 = arith.constant 0x4B220ADA : f32
    %235 = vector.broadcast %cst_83 : f32 to vector<8x256xf32>
    %236 = arith.addf %234, %235 : vector<8x256xf32>
    %237 = arith.mulf %233, %189 : vector<8x256xf32>
    %cst_84 = arith.constant 4.032000e+04 : f32
    %238 = vector.broadcast %cst_84 : f32 to vector<8x256xf32>
    %239 = arith.addf %237, %238 : vector<8x256xf32>
    %240 = arith.divf %236, %239 : vector<8x256xf32>
    %cst_85 = arith.constant 7.000000e+00 : f32
    %241 = vector.broadcast %cst_85 : f32 to vector<8x256xf32>
    %242 = arith.addf %189, %241 : vector<8x256xf32>
    %cst_86 = arith.constant 5.000000e-01 : f32
    %243 = vector.broadcast %cst_86 : f32 to vector<8x256xf32>
    %244 = arith.addf %242, %243 : vector<8x256xf32>
    %cst_87 = arith.constant 5.000000e-01 : f32
    %245 = vector.broadcast %cst_87 : f32 to vector<8x256xf32>
    %246 = arith.addf %189, %245 : vector<8x256xf32>
    %247 = math.log %244 : vector<8x256xf32>
    %248 = arith.mulf %246, %247 : vector<8x256xf32>
    %cst_88 = arith.constant 0.918938517 : f32
    %249 = vector.broadcast %cst_88 : f32 to vector<8x256xf32>
    %250 = arith.addf %249, %248 : vector<8x256xf32>
    %251 = arith.subf %250, %244 : vector<8x256xf32>
    %252 = math.log %240 : vector<8x256xf32>
    %253 = arith.addf %251, %252 : vector<8x256xf32>
    %254 = arith.subf %185, %253 : vector<8x256xf32>
    %cst_89 = arith.constant 9.99999993E-9 : f32
    %255 = vector.broadcast %cst_89 : f32 to vector<8x256xf32>
    %256 = arith.cmpf olt, %1, %255 : vector<8x256xf32>
    %cst_90 = arith.constant 0.000000e+00 : f32
    %257 = vector.broadcast %cst_90 : f32 to vector<8x256xf32>
    %258 = arith.select %256, %107, %257 : vector<8x256xi1>, vector<8x256xf32>
    %cst_91 = arith.constant 9.99999993E-9 : f32
    %259 = vector.broadcast %cst_91 : f32 to vector<8x256xf32>
    %260 = arith.cmpf ogt, %1, %259 : vector<8x256xf32>
    %cst_92 = arith.constant 0.000000e+00 : f32
    %261 = vector.broadcast %cst_92 : f32 to vector<8x256xf32>
    %262 = arith.select %260, %254, %261 : vector<8x256xi1>, vector<8x256xf32>
    %263 = arith.addf %258, %262 : vector<8x256xf32>
    %264 = vector.extract_strided_slice %263 {offsets = [0, 0], sizes = [8, 128], strides = [1, 1]} : vector<8x256xf32> to vector<8x128xf32>
    %265 = vector.extract_strided_slice %263 {offsets = [0, 128], sizes = [8, 128], strides = [1, 1]} : vector<8x256xf32> to vector<8x128xf32>
    %266 = arith.addf %264, %265 : vector<8x128xf32>
    %c0_93 = arith.constant 0 : index
    %c0_94 = arith.constant 0 : index
    %267 = vector.load %arg20[%c0_93, %c0_94] : memref<8x128xf32, #tpu.memory_space<vmem>>, vector<8x128xf32>
    %268 = arith.addf %267, %266 : vector<8x128xf32>
    %c0_95 = arith.constant 0 : index
    %c0_96 = arith.constant 0 : index
    %269 = vector.load %arg20[%c0_95, %c0_96] : memref<8x128xf32, #tpu.memory_space<vmem>>, vector<8x128xf32>
    tpu.vector_store %arg20[%c0_95, %c0_96], %268 {strides = array<i32>} : memref<8x128xf32, #tpu.memory_space<vmem>>, vector<8x128xf32>,
    %c0_i32_97 = arith.constant 0 : i32
    %270 = arith.cmpi eq, %arg1, %c0_i32_97 : i32
    %271 = arith.extui %270 : i1 to i32
    %c0_i32_98 = arith.constant 0 : i32
    %272 = arith.cmpi ne, %271, %c0_i32_98 : i32
    scf.if %272 {
      %c0_99 = arith.constant 0 : index
      %c0_100 = arith.constant 0 : index
      %273 = vector.load %arg20[%c0_99, %c0_100] : memref<8x128xf32, #tpu.memory_space<vmem>>, vector<8x128xf32>
      %cst_101 = arith.constant dense<0.000000e+00> : vector<8xf32>
      %274 = vector.multi_reduction <add>, %273, %cst_101 [1] : vector<8x128xf32> to vector<8xf32>
      %275 = vector.shape_cast %274 : vector<8xf32> to vector<8x1xf32>
      %cst_102 = arith.constant 0.000000e+00 : f32
      %276 = vector.broadcast %cst_102 : f32 to vector<8x1xf32>
      %277 = arith.subf %276, %275 : vector<8x1xf32>
      %c0_103 = arith.constant 0 : index
      %c0_104 = arith.constant 0 : index
      %278 = vector.load %arg8[%c0_103, %c0_104] : memref<8x1xf32, #tpu.memory_space<vmem>>, vector<8x1xf32>
      %c0_105 = arith.constant 0 : index
      %c0_106 = arith.constant 0 : index
      %279 = vector.load %arg9[%c0_105, %c0_106] : memref<8x1xf32, #tpu.memory_space<vmem>>, vector<8x1xf32>
      %c0_107 = arith.constant 0 : index
      %c0_108 = arith.constant 0 : index
      %280 = vector.load %arg10[%c0_107, %c0_108] : memref<8x1xf32, #tpu.memory_space<vmem>>, vector<8x1xf32>
      %c0_109 = arith.constant 0 : index
      %c0_110 = arith.constant 0 : index
      %281 = vector.load %arg11[%c0_109, %c0_110] : memref<8x1xf32, #tpu.memory_space<vmem>>, vector<8x1xf32>
      %282 = arith.divf %281, %279 : vector<8x1xf32>
      %283 = math.log %282 : vector<8x1xf32>
      %cst_111 = arith.constant 5.000000e-01 : f32
      %284 = vector.broadcast %cst_111 : f32 to vector<8x1xf32>
      %285 = arith.mulf %284, %283 : vector<8x1xf32>
      %286 = arith.subf %278, %280 : vector<8x1xf32>
      %287 = arith.mulf %286, %286 : vector<8x1xf32>
      %288 = arith.addf %279, %287 : vector<8x1xf32>
      %cst_112 = arith.constant 2.000000e+00 : f32
      %289 = vector.broadcast %cst_112 : f32 to vector<8x1xf32>
      %290 = arith.mulf %289, %281 : vector<8x1xf32>
      %291 = arith.divf %288, %290 : vector<8x1xf32>
      %292 = arith.addf %285, %291 : vector<8x1xf32>
      %cst_113 = arith.constant 5.000000e-01 : f32
      %293 = vector.broadcast %cst_113 : f32 to vector<8x1xf32>
      %294 = arith.subf %292, %293 : vector<8x1xf32>
      %cst_114 = arith.constant dense<0.000000e+00> : vector<8xf32>
      %295 = vector.multi_reduction <add>, %294, %cst_114 [1] : vector<8x1xf32> to vector<8xf32>
      %296 = vector.shape_cast %295 : vector<8xf32> to vector<8x1xf32>
      %297 = arith.addf %277, %296 : vector<8x1xf32>
      %c0_115 = arith.constant 0 : index
      %c0_116 = arith.constant 0 : index
      %298 = vector.load %arg16[%c0_115, %c0_116] : memref<8x1xf32, #tpu.memory_space<vmem>>, vector<8x1xf32>
      tpu.vector_store %arg16[%c0_115, %c0_116], %297 {strides = array<i32>} : memref<8x1xf32, #tpu.memory_space<vmem>>, vector<8x1xf32>,
      %c0_117 = arith.constant 0 : index
      %c0_118 = arith.constant 0 : index
      %299 = vector.load %arg6[%c0_117, %c0_118] : memref<8x32xf32, #tpu.memory_space<vmem>>, vector<8x32xf32>
      %c0_119 = arith.constant 0 : index
      %c0_120 = arith.constant 0 : index
      %300 = vector.load %arg7[%c0_119, %c0_120] : memref<8x32xf32, #tpu.memory_space<vmem>>, vector<8x32xf32>
      %301 = arith.mulf %299, %299 : vector<8x32xf32>
      %302 = arith.addf %300, %301 : vector<8x32xf32>
      %303 = math.log %300 : vector<8x32xf32>
      %304 = arith.subf %302, %303 : vector<8x32xf32>
      %cst_121 = arith.constant 1.000000e+00 : f32
      %305 = vector.broadcast %cst_121 : f32 to vector<8x32xf32>
      %306 = arith.subf %304, %305 : vector<8x32xf32>
      %cst_122 = arith.constant 5.000000e-01 : f32
      %307 = vector.broadcast %cst_122 : f32 to vector<8x32xf32>
      %308 = arith.mulf %307, %306 : vector<8x32xf32>
      %cst_123 = arith.constant dense<0.000000e+00> : vector<8xf32>
      %309 = vector.multi_reduction <add>, %308, %cst_123 [1] : vector<8x32xf32> to vector<8xf32>
      %310 = vector.shape_cast %309 : vector<8xf32> to vector<8x1xf32>
      %c0_124 = arith.constant 0 : index
      %c0_125 = arith.constant 0 : index
      %311 = vector.load %arg17[%c0_124, %c0_125] : memref<8x1xf32, #tpu.memory_space<vmem>>, vector<8x1xf32>
      tpu.vector_store %arg17[%c0_124, %c0_125], %310 {strides = array<i32>} : memref<8x1xf32, #tpu.memory_space<vmem>>, vector<8x1xf32>,
      %c0_126 = arith.constant 0 : index
      %c0_127 = arith.constant 0 : index
      %312 = vector.load %arg12[%c0_126, %c0_127] : memref<8x10xf32, #tpu.memory_space<vmem>>, vector<8x10xf32>
      %cst_128 = arith.constant dense<0xFF800000> : vector<8xf32>
      %313 = vector.multi_reduction <maximumf>, %312, %cst_128 [1] : vector<8x10xf32> to vector<8xf32>
      %314 = vector.shape_cast %313 : vector<8xf32> to vector<8x1xf32>
      %315 = vector.broadcast %314 : vector<8x1xf32> to vector<8x10xf32>
      %316 = arith.subf %312, %315 : vector<8x10xf32>
      %317 = math.exp %316 : vector<8x10xf32>
      %cst_129 = arith.constant dense<0.000000e+00> : vector<8xf32>
      %318 = vector.multi_reduction <add>, %317, %cst_129 [1] : vector<8x10xf32> to vector<8xf32>
      %319 = vector.shape_cast %318 : vector<8xf32> to vector<8x1xf32>
      %320 = math.log %319 : vector<8x1xf32>
      %c0_130 = arith.constant 0 : index
      %c0_131 = arith.constant 0 : index
      %321 = vector.load %arg13[%c0_130, %c0_131] : memref<8x10xf32, #tpu.memory_space<vmem>>, vector<8x10xf32>
      %322 = vector.broadcast %320 : vector<8x1xf32> to vector<8x10xf32>
      %323 = arith.subf %316, %322 : vector<8x10xf32>
      %324 = arith.mulf %321, %323 : vector<8x10xf32>
      %cst_132 = arith.constant dense<0.000000e+00> : vector<8xf32>
      %325 = vector.multi_reduction <add>, %324, %cst_132 [1] : vector<8x10xf32> to vector<8xf32>
      %326 = vector.shape_cast %325 : vector<8xf32> to vector<8x1xf32>
      %cst_133 = arith.constant 0.000000e+00 : f32
      %327 = vector.broadcast %cst_133 : f32 to vector<8x1xf32>
      %328 = arith.subf %327, %326 : vector<8x1xf32>
      %c0_134 = arith.constant 0 : index
      %c0_135 = arith.constant 0 : index
      %329 = vector.load %arg18[%c0_134, %c0_135] : memref<8x1xf32, #tpu.memory_space<vmem>>, vector<8x1xf32>
      tpu.vector_store %arg18[%c0_134, %c0_135], %328 {strides = array<i32>} : memref<8x1xf32, #tpu.memory_space<vmem>>, vector<8x1xf32>,
      %cst_136 = arith.constant 0.000000e+00 : f32
      %330 = vector.broadcast %cst_136 : f32 to vector<8x1xf32>
      %c0_137 = arith.constant 0 : index
      %c0_138 = arith.constant 0 : index
      %c0_139 = arith.constant 0 : index
      %331 = vector.load %arg14[%c0_137, %c0_138, %c0_139] : memref<2x8x32xf32, #tpu.memory_space<vmem>>, vector<1x8x32xf32>
      %332 = vector.shape_cast %331 : vector<1x8x32xf32> to vector<8x32xf32>
      %333 = arith.subf %299, %332 : vector<8x32xf32>
      %cst_140 = arith.constant 9.99999997E-7 : f32
      %334 = vector.broadcast %cst_140 : f32 to vector<8x32xf32>
      %335 = arith.addf %333, %334 : vector<8x32xf32>
      %336 = arith.mulf %335, %335 : vector<8x32xf32>
      %cst_141 = arith.constant dense<0.000000e+00> : vector<8xf32>
      %337 = vector.multi_reduction <add>, %336, %cst_141 [1] : vector<8x32xf32> to vector<8xf32>
      %338 = vector.shape_cast %337 : vector<8xf32> to vector<8x1xf32>
      %339 = math.sqrt %338 : vector<8x1xf32>
      %c0_142 = arith.constant 0 : index
      %c0_143 = arith.constant 0 : index
      %c0_144 = arith.constant 0 : index
      %340 = vector.load %arg15[%c0_142, %c0_143, %c0_144] : memref<2x8x32xf32, #tpu.memory_space<vmem>>, vector<1x8x32xf32>
      %341 = vector.shape_cast %340 : vector<1x8x32xf32> to vector<8x32xf32>
      %342 = arith.subf %299, %341 : vector<8x32xf32>
      %cst_145 = arith.constant 9.99999997E-7 : f32
      %343 = vector.broadcast %cst_145 : f32 to vector<8x32xf32>
      %344 = arith.addf %342, %343 : vector<8x32xf32>
      %345 = arith.mulf %344, %344 : vector<8x32xf32>
      %cst_146 = arith.constant dense<0.000000e+00> : vector<8xf32>
      %346 = vector.multi_reduction <add>, %345, %cst_146 [1] : vector<8x32xf32> to vector<8xf32>
      %347 = vector.shape_cast %346 : vector<8xf32> to vector<8x1xf32>
      %348 = math.sqrt %347 : vector<8x1xf32>
      %349 = arith.subf %339, %348 : vector<8x1xf32>
      %cst_147 = arith.constant 1.000000e+00 : f32
      %350 = vector.broadcast %cst_147 : f32 to vector<8x1xf32>
      %351 = arith.addf %349, %350 : vector<8x1xf32>
      %cst_148 = arith.constant 0.000000e+00 : f32
      %352 = vector.broadcast %cst_148 : f32 to vector<8x1xf32>
      %353 = arith.maximumf %351, %352 : vector<8x1xf32>
      %354 = arith.addf %330, %353 : vector<8x1xf32>
      %c1 = arith.constant 1 : index
      %c0_149 = arith.constant 0 : index
      %c0_150 = arith.constant 0 : index
      %355 = vector.load %arg14[%c1, %c0_149, %c0_150] : memref<2x8x32xf32, #tpu.memory_space<vmem>>, vector<1x8x32xf32>
      %356 = vector.shape_cast %355 : vector<1x8x32xf32> to vector<8x32xf32>
      %357 = arith.subf %299, %356 : vector<8x32xf32>
      %cst_151 = arith.constant 9.99999997E-7 : f32
      %358 = vector.broadcast %cst_151 : f32 to vector<8x32xf32>
      %359 = arith.addf %357, %358 : vector<8x32xf32>
      %360 = arith.mulf %359, %359 : vector<8x32xf32>
      %cst_152 = arith.constant dense<0.000000e+00> : vector<8xf32>
      %361 = vector.multi_reduction <add>, %360, %cst_152 [1] : vector<8x32xf32> to vector<8xf32>
      %362 = vector.shape_cast %361 : vector<8xf32> to vector<8x1xf32>
      %363 = math.sqrt %362 : vector<8x1xf32>
      %c1_153 = arith.constant 1 : index
      %c0_154 = arith.constant 0 : index
      %c0_155 = arith.constant 0 : index
      %364 = vector.load %arg15[%c1_153, %c0_154, %c0_155] : memref<2x8x32xf32, #tpu.memory_space<vmem>>, vector<1x8x32xf32>
      %365 = vector.shape_cast %364 : vector<1x8x32xf32> to vector<8x32xf32>
      %366 = arith.subf %299, %365 : vector<8x32xf32>
      %cst_156 = arith.constant 9.99999997E-7 : f32
      %367 = vector.broadcast %cst_156 : f32 to vector<8x32xf32>
      %368 = arith.addf %366, %367 : vector<8x32xf32>
      %369 = arith.mulf %368, %368 : vector<8x32xf32>
      %cst_157 = arith.constant dense<0.000000e+00> : vector<8xf32>
      %370 = vector.multi_reduction <add>, %369, %cst_157 [1] : vector<8x32xf32> to vector<8xf32>
      %371 = vector.shape_cast %370 : vector<8xf32> to vector<8x1xf32>
      %372 = math.sqrt %371 : vector<8x1xf32>
      %373 = arith.subf %363, %372 : vector<8x1xf32>
      %cst_158 = arith.constant 1.000000e+00 : f32
      %374 = vector.broadcast %cst_158 : f32 to vector<8x1xf32>
      %375 = arith.addf %373, %374 : vector<8x1xf32>
      %cst_159 = arith.constant 0.000000e+00 : f32
      %376 = vector.broadcast %cst_159 : f32 to vector<8x1xf32>
      %377 = arith.maximumf %375, %376 : vector<8x1xf32>
      %378 = arith.addf %354, %377 : vector<8x1xf32>
      %c0_160 = arith.constant 0 : index
      %c0_161 = arith.constant 0 : index
      %379 = vector.load %arg19[%c0_160, %c0_161] : memref<8x1xf32, #tpu.memory_space<vmem>>, vector<8x1xf32>
      tpu.vector_store %arg19[%c0_160, %c0_161], %378 {strides = array<i32>} : memref<8x1xf32, #tpu.memory_space<vmem>>, vector<8x1xf32>,
    } else {
    }
    return
  }
  func.func @transform_0(%arg0: i32, %arg1: i32) -> (i32, i32) {
    %c0_i32 = arith.constant 0 : i32
    return %arg0, %arg1 : i32, i32
  }
  func.func @transform_1(%arg0: i32, %arg1: i32) -> (i32, i32) {
    %c0_i32 = arith.constant 0 : i32
    return %arg0, %arg1 : i32, i32
  }
  func.func @transform_2(%arg0: i32, %arg1: i32) -> (i32, i32) {
    %c0_i32 = arith.constant 0 : i32
    return %arg0, %arg1 : i32, i32
  }
  func.func @transform_3(%arg0: i32, %arg1: i32) -> (i32, i32) {
    %c0_i32 = arith.constant 0 : i32
    return %arg0, %arg1 : i32, i32
  }
  func.func @transform_4(%arg0: i32, %arg1: i32) -> (i32, i32) {
    %c0_i32 = arith.constant 0 : i32
    %c0_i32_0 = arith.constant 0 : i32
    return %arg0, %c0_i32 : i32, i32
  }
  func.func @transform_5(%arg0: i32, %arg1: i32) -> (i32, i32) {
    %c0_i32 = arith.constant 0 : i32
    %c0_i32_0 = arith.constant 0 : i32
    return %arg0, %c0_i32 : i32, i32
  }
  func.func @transform_6(%arg0: i32, %arg1: i32) -> (i32, i32) {
    %c0_i32 = arith.constant 0 : i32
    %c0_i32_0 = arith.constant 0 : i32
    return %arg0, %c0_i32 : i32, i32
  }
  func.func @transform_7(%arg0: i32, %arg1: i32) -> (i32, i32) {
    %c0_i32 = arith.constant 0 : i32
    %c0_i32_0 = arith.constant 0 : i32
    return %arg0, %c0_i32 : i32, i32
  }
  func.func @transform_8(%arg0: i32, %arg1: i32) -> (i32, i32) {
    %c0_i32 = arith.constant 0 : i32
    %c0_i32_0 = arith.constant 0 : i32
    return %arg0, %c0_i32 : i32, i32
  }
  func.func @transform_9(%arg0: i32, %arg1: i32) -> (i32, i32) {
    %c0_i32 = arith.constant 0 : i32
    %c0_i32_0 = arith.constant 0 : i32
    return %arg0, %c0_i32 : i32, i32
  }
  func.func @transform_10(%arg0: i32, %arg1: i32) -> (i32, i32) {
    %c0_i32 = arith.constant 0 : i32
    %c0_i32_0 = arith.constant 0 : i32
    return %arg0, %c0_i32 : i32, i32
  }
  func.func @transform_11(%arg0: i32, %arg1: i32) -> (i32, i32) {
    %c0_i32 = arith.constant 0 : i32
    %c0_i32_0 = arith.constant 0 : i32
    return %arg0, %c0_i32 : i32, i32
  }
  func.func @transform_12(%arg0: i32, %arg1: i32) -> (i32, i32, i32) {
    %c0_i32 = arith.constant 0 : i32
    %c0_i32_0 = arith.constant 0 : i32
    %c0_i32_1 = arith.constant 0 : i32
    return %c0_i32, %arg0, %c0_i32_0 : i32, i32, i32
  }
  func.func @transform_13(%arg0: i32, %arg1: i32) -> (i32, i32, i32) {
    %c0_i32 = arith.constant 0 : i32
    %c0_i32_0 = arith.constant 0 : i32
    %c0_i32_1 = arith.constant 0 : i32
    return %c0_i32, %arg0, %c0_i32_0 : i32, i32, i32
  }
  func.func @transform_14(%arg0: i32, %arg1: i32) -> (i32, i32) {
    %c0_i32 = arith.constant 0 : i32
    %c0_i32_0 = arith.constant 0 : i32
    return %arg0, %c0_i32 : i32, i32
  }
  func.func @transform_15(%arg0: i32, %arg1: i32) -> (i32, i32) {
    %c0_i32 = arith.constant 0 : i32
    %c0_i32_0 = arith.constant 0 : i32
    return %arg0, %c0_i32 : i32, i32
  }
  func.func @transform_16(%arg0: i32, %arg1: i32) -> (i32, i32) {
    %c0_i32 = arith.constant 0 : i32
    %c0_i32_0 = arith.constant 0 : i32
    return %arg0, %c0_i32 : i32, i32
  }
  func.func @transform_17(%arg0: i32, %arg1: i32) -> (i32, i32) {
    %c0_i32 = arith.constant 0 : i32
    %c0_i32_0 = arith.constant 0 : i32
    return %arg0, %c0_i32 : i32, i32
  }
}

</mosaic_0001>

<llo_original>
// kernel: tpu_custom_call.1
$region0: #{tpu_custom_call.1}
  #allocation0 [shape = 'u32[]', space=smem, size = 0x4, offset = 0x4, fixed_abs, tag = 'smem constant byte address 0x4 - core index']
  #allocation1 [shape = 'u32[144,128]{1,0:T(1,128)}', space=vmem, size = 0x12000, scoped, tag = 'internal scratch']
  #allocation2 [shape = 'f32[8,128]{1,0:T(8,128)}', space=vmem, size = 0x1000, scoped, tag = 'scratch operand']
  %s0 = inlined_call_operand.vmem [shape: f32[8,256], index: 0, kind: input, shape index: {}]
  %s1 = inlined_call_operand.vmem [shape: f32[8,256], index: 1, kind: input, shape index: {}]
  %s2 = inlined_call_operand.hbm [shape: f32[8,256], index: 2, kind: input, shape index: {}]
  %s3 = inlined_call_operand.hbm [shape: f32[8,256], index: 3, kind: input, shape index: {}]
  %s4 = inlined_call_operand.hbm [shape: f32[8,32], index: 4, kind: input, shape index: {}]
  %s5 = inlined_call_operand.hbm [shape: f32[8,32], index: 5, kind: input, shape index: {}]
  %s6 = inlined_call_operand.vmem [shape: f32[8,1], index: 6, kind: input, shape index: {}]
  %s7 = inlined_call_operand.vmem [shape: f32[8,1], index: 7, kind: input, shape index: {}]
  %s8 = inlined_call_operand.vmem [shape: f32[8,1], index: 8, kind: input, shape index: {}]
  %s9 = inlined_call_operand.vmem [shape: f32[8,1], index: 9, kind: input, shape index: {}]
  %s10 = inlined_call_operand.hbm [shape: f32[8,10], index: 10, kind: input, shape index: {}]
  %s11 = inlined_call_operand.vmem [shape: f32[8,10], index: 11, kind: input, shape index: {}]
  %s12 = inlined_call_operand.vmem [shape: f32[2,8,32], index: 12, kind: input, shape index: {}]
  %s13 = inlined_call_operand.hbm [shape: f32[2,8,32], index: 13, kind: input, shape index: {}]
  %s14 = inlined_call_operand.vmem [shape: f32[8,1], index: 14, kind: output, shape index: {0}]
  %s15 = inlined_call_operand.vmem [shape: f32[8,1], index: 15, kind: output, shape index: {1}]
  %s16 = inlined_call_operand.vmem [shape: f32[8,1], index: 16, kind: output, shape index: {2}]
  %s17 = inlined_call_operand.vmem [shape: f32[8,1], index: 17, kind: output, shape index: {3}]
  %18 = xla_tuple %s14, %s15, %s16, %s17
  %s19 = sld [smem:[#allocation0]]
  $region122: #{tpu_custom_call.1} parent=0
    _
  %s21 = ssub.s32 1, %s19
  %s22 = scalar_select 0, %s21, %s19
  $region1: #{tpu_custom_call.1} parent=0
    #allocation3 [shape = 'u8[8192]{0}', space=vmem, size = 0x2000, scoped, tag = 'input window, operand 2, single buffered']
    #allocation4 [shape = 's32[1]{0}', space=sflag, size = 0x4, scoped, tag = 'scoped memory for tpu_custom_call.1']
    #allocation5 [shape = 'u8[8192]{0}', space=vmem, size = 0x2000, scoped, tag = 'input window, operand 3, single buffered']
    #allocation6 [shape = 's32[1]{0}', space=sflag, size = 0x4, scoped, tag = 'scoped memory for tpu_custom_call.1']
    #allocation7 [shape = 'u8[4096]{0}', space=vmem, size = 0x1000, scoped, tag = 'input window, operand 4, single buffered']
    #allocation8 [shape = 'u8[4096]{0}', space=vmem, size = 0x1000, scoped, tag = 'input window, operand 5, single buffered']
    #allocation9 [shape = 's32[1]{0}', space=sflag, size = 0x4, scoped, tag = 'scoped memory for tpu_custom_call.1']
    #allocation10 [shape = 'u8[4096]{0}', space=vmem, size = 0x1000, scoped, tag = 'input window, operand 10, single buffered']
    #allocation11 [shape = 'u8[8192]{0}', space=vmem, size = 0x2000, scoped, tag = 'input window, operand 13, single buffered']
    #allocation12 [shape = 's32[1]{0}', space=sflag, size = 0x4, scoped, tag = 'scoped memory for tpu_custom_call.1']
    %23 = vsyncpa [#allocation4], 0
    %24 = vsyncpa [#allocation6], 0
    %25 = vsyncpa [#allocation9], 0
    %26 = vsyncpa [#allocation12], 0
    // Predicated region
    $region2: #{tpu_custom_call.1} parent=1 // pred_check
      _
    $region3: #{tpu_custom_call.1} parent=1 // pred_check_branch
      %28 = sbr.rel (0) target = $region5
    $region4: #{tpu_custom_call.1} parent=1 // pred_region
      _
    $region5: #{tpu_custom_call.1} parent=1 // pred_fallthru
      _
    // Predicated region
    $region6: #{tpu_custom_call.1} parent=1 // pred_check
      _
    $region7: #{tpu_custom_call.1} parent=1 // pred_check_branch
      %30 = sbr.rel (0) target = $region9
    $region8: #{tpu_custom_call.1} parent=1 // pred_region
      _
    $region9: #{tpu_custom_call.1} parent=1 // pred_fallthru
      _
    // Predicated region
    $region10: #{tpu_custom_call.1} parent=1 // pred_check
      _
    $region11: #{tpu_custom_call.1} parent=1 // pred_check_branch
      %32 = sbr.rel (0) target = $region13
    $region12: #{tpu_custom_call.1} parent=1 // pred_region
      %s34 = ssub.s32 256, 256
      %35 = vsyncadd [#allocation4], %s34
      %s37 = sshll.u32 [#allocation3], 4
      %s38 = int_to_ptr.vmem [resolvable:$true] %s37
      %40 = dma.hbm_to_vmem [thread:$0]  %s2, 256, %s38, [#allocation4]
    $region13: #{tpu_custom_call.1} parent=1 // pred_fallthru
      _
    // Predicated region
    $region14: #{tpu_custom_call.1} parent=1 // pred_check
      _
    $region15: #{tpu_custom_call.1} parent=1 // pred_check_branch
      %42 = sbr.rel (0) target = $region17
    $region16: #{tpu_custom_call.1} parent=1 // pred_region
      %s44 = ssub.s32 256, 256
      %45 = vsyncadd [#allocation6], %s44
      %s47 = sshll.u32 [#allocation5], 4
      %s48 = int_to_ptr.vmem [resolvable:$true] %s47
      %50 = dma.hbm_to_vmem [thread:$0]  %s3, 256, %s48, [#allocation6]
    $region17: #{tpu_custom_call.1} parent=1 // pred_fallthru
      _
    // Predicated region
    $region18: #{tpu_custom_call.1} parent=1 // pred_check
      _
    $region19: #{tpu_custom_call.1} parent=1 // pred_check_branch
      %52 = sbr.rel (0) target = $region21
    $region20: #{tpu_custom_call.1} parent=1 // pred_region
      %s54 = ssub.s32 128, 128
      %55 = vsyncadd [#allocation6], %s54
      %s57 = sshll.u32 [#allocation7], 4
      %s58 = int_to_ptr.vmem [resolvable:$true] %s57
      %60 = dma.hbm_to_vmem [thread:$0]  %s4, 128, %s58, [#allocation6]
    $region21: #{tpu_custom_call.1} parent=1 // pred_fallthru
      _
    // Predicated region
    $region22: #{tpu_custom_call.1} parent=1 // pred_check
      _
    $region23: #{tpu_custom_call.1} parent=1 // pred_check_branch
      %62 = sbr.rel (0) target = $region25
    $region24: #{tpu_custom_call.1} parent=1 // pred_region
      %s64 = ssub.s32 128, 128
      %65 = vsyncadd [#allocation9], %s64
      %s67 = sshll.u32 [#allocation8], 4
      %s68 = int_to_ptr.vmem [resolvable:$true] %s67
      %70 = dma.hbm_to_vmem [thread:$0]  %s5, 128, %s68, [#allocation9]
    $region25: #{tpu_custom_call.1} parent=1 // pred_fallthru
      _
    // Predicated region
    $region26: #{tpu_custom_call.1} parent=1 // pred_check
      _
    $region27: #{tpu_custom_call.1} parent=1 // pred_check_branch
      %72 = sbr.rel (0) target = $region29
    $region28: #{tpu_custom_call.1} parent=1 // pred_region
      _
    $region29: #{tpu_custom_call.1} parent=1 // pred_fallthru
      _
    // Predicated region
    $region30: #{tpu_custom_call.1} parent=1 // pred_check
      _
    $region31: #{tpu_custom_call.1} parent=1 // pred_check_branch
      %74 = sbr.rel (0) target = $region33
    $region32: #{tpu_custom_call.1} parent=1 // pred_region
      _
    $region33: #{tpu_custom_call.1} parent=1 // pred_fallthru
      _
    // Predicated region
    $region34: #{tpu_custom_call.1} parent=1 // pred_check
      _
    $region35: #{tpu_custom_call.1} parent=1 // pred_check_branch
      %76 = sbr.rel (0) target = $region37
    $region36: #{tpu_custom_call.1} parent=1 // pred_region
      _
    $region37: #{tpu_custom_call.1} parent=1 // pred_fallthru
      _
    // Predicated region
    $region38: #{tpu_custom_call.1} parent=1 // pred_check
      _
    $region39: #{tpu_custom_call.1} parent=1 // pred_check_branch
      %78 = sbr.rel (0) target = $region41
    $region40: #{tpu_custom_call.1} parent=1 // pred_region
      _
    $region41: #{tpu_custom_call.1} parent=1 // pred_fallthru
      _
    // Predicated region
    $region42: #{tpu_custom_call.1} parent=1 // pred_check
      _
    $region43: #{tpu_custom_call.1} parent=1 // pred_check_branch
      %80 = sbr.rel (0) target = $region45
    $region44: #{tpu_custom_call.1} parent=1 // pred_region
      %s82 = ssub.s32 128, 128
      %83 = vsyncadd [#allocation9], %s82
      %s85 = sshll.u32 [#allocation10], 4
      %s86 = int_to_ptr.vmem [resolvable:$true] %s85
      %88 = dma.hbm_to_vmem [thread:$0]  %s10, 128, %s86, [#allocation9]
    $region45: #{tpu_custom_call.1} parent=1 // pred_fallthru
      _
    // Predicated region
    $region46: #{tpu_custom_call.1} parent=1 // pred_check
      _
    $region47: #{tpu_custom_call.1} parent=1 // pred_check_branch
      %90 = sbr.rel (0) target = $region49
    $region48: #{tpu_custom_call.1} parent=1 // pred_region
      _
    $region49: #{tpu_custom_call.1} parent=1 // pred_fallthru
      _
    // Predicated region
    $region50: #{tpu_custom_call.1} parent=1 // pred_check
      _
    $region51: #{tpu_custom_call.1} parent=1 // pred_check_branch
      %92 = sbr.rel (0) target = $region53
    $region52: #{tpu_custom_call.1} parent=1 // pred_region
      _
    $region53: #{tpu_custom_call.1} parent=1 // pred_fallthru
      _
    // Predicated region
    $region54: #{tpu_custom_call.1} parent=1 // pred_check
      _
    $region55: #{tpu_custom_call.1} parent=1 // pred_check_branch
      %94 = sbr.rel (0) target = $region57
    $region56: #{tpu_custom_call.1} parent=1 // pred_region
      %s96 = ssub.s32 256, 256
      %97 = vsyncadd [#allocation12], %s96
      %s98 = sshll.u32 [#allocation11], 4
      %s99 = int_to_ptr.vmem [resolvable:$true] %s98
      %104 = dma.hbm_to_vmem [thread:$0]  %s13, 256, %s99, [#allocation12], 128, 128, 8
    $region57: #{tpu_custom_call.1} parent=1 // pred_fallthru
      _
    // Predicated region
    $region58: #{tpu_custom_call.1} parent=1 // pred_check
      _
    $region59: #{tpu_custom_call.1} parent=1 // pred_check_branch
      %106 = sbr.rel (0) target = $region61
    $region60: #{tpu_custom_call.1} parent=1 // pred_region
      %107 = dma.done [#allocation4], 256
    $region61: #{tpu_custom_call.1} parent=1 // pred_fallthru
      _
    // Predicated region
    $region62: #{tpu_custom_call.1} parent=1 // pred_check
      _
    $region63: #{tpu_custom_call.1} parent=1 // pred_check_branch
      %109 = sbr.rel (0) target = $region65
    $region64: #{tpu_custom_call.1} parent=1 // pred_region
      %110 = dma.done [#allocation6], 256
    $region65: #{tpu_custom_call.1} parent=1 // pred_fallthru
      _
    // Predicated region
    $region66: #{tpu_custom_call.1} parent=1 // pred_check
      _
    $region67: #{tpu_custom_call.1} parent=1 // pred_check_branch
      %112 = sbr.rel (0) target = $region69
    $region68: #{tpu_custom_call.1} parent=1 // pred_region
      %113 = dma.done [#allocation6], 128
    $region69: #{tpu_custom_call.1} parent=1 // pred_fallthru
      _
    // Predicated region
    $region70: #{tpu_custom_call.1} parent=1 // pred_check
      _
    $region71: #{tpu_custom_call.1} parent=1 // pred_check_branch
      %115 = sbr.rel (0) target = $region73
    $region72: #{tpu_custom_call.1} parent=1 // pred_region
      %116 = dma.done [#allocation9], 128
    $region73: #{tpu_custom_call.1} parent=1 // pred_fallthru
      _
    // Predicated region
    $region74: #{tpu_custom_call.1} parent=1 // pred_check
      _
    $region75: #{tpu_custom_call.1} parent=1 // pred_check_branch
      %118 = sbr.rel (0) target = $region77
    $region76: #{tpu_custom_call.1} parent=1 // pred_region
      %119 = dma.done [#allocation9], 128
    $region77: #{tpu_custom_call.1} parent=1 // pred_fallthru
      _
    // Predicated region
    $region78: #{tpu_custom_call.1} parent=1 // pred_check
      _
    $region79: #{tpu_custom_call.1} parent=1 // pred_check_branch
      %121 = sbr.rel (0) target = $region81
    $region80: #{tpu_custom_call.1} parent=1 // pred_region
      %122 = dma.done [#allocation12], 256
    $region81: #{tpu_custom_call.1} parent=1 // pred_fallthru
      _
    %v123 = vld [vmem:[#allocation5] sm:$0xff]
    %v124 = vld [vmem:[#allocation5 + $0x8] sm:$0xff]
    %v125 = vld [vmem:[%s0] sm:$0xff]
    %v126 = vld [vmem:[%s0 + $0x8] sm:$0xff]
    %v127 = vld [vmem:[%s1] sm:$0xff]
    %v128 = vld [vmem:[%s1 + $0x8] sm:$0xff]
    %v129 = vld [vmem:[#allocation3] sm:$0xff]
    %v130 = vld [vmem:[#allocation3 + $0x8] sm:$0xff]
    %v131 = vadd.f32 %v123, 1e-08
    %v132 = vadd.f32 %v124, 1e-08
    %v133 = vlog2.pop %v131
    %v134 = vmul.f32 %v133, 0.6931472
    %v135 = vlog2.pop %v132
    %v136 = vmul.f32 %v135, 0.6931472
    %v137 = vsub.f32 %v123, 1.0
    %v138 = vsub.f32 %v124, 1.0
    %v139 = vadd.f32 %v137, 60.458332
    %v140 = vadd.f32 %v138, 60.458332
    %v141 = vadd.f32 %v137, 36.0
    %v142 = vadd.f32 %v138, 36.0
    %v143 = vmul.f32 %v139, %v137
    %v144 = vmul.f32 %v140, %v138
    %v145 = vadd.f32 %v143, 1599.0425
    %v146 = vadd.f32 %v144, 1599.0425
    %v147 = vmul.f32 %v141, %v137
    %v148 = vmul.f32 %v142, %v138
    %v149 = vadd.f32 %v147, 546.0
    %v150 = vadd.f32 %v148, 546.0
    %v151 = vmul.f32 %v145, %v137
    %v152 = vmul.f32 %v146, %v138
    %v153 = vadd.f32 %v151, 24165.51
    %v154 = vadd.f32 %v152, 24165.51
    %v155 = vmul.f32 %v149, %v137
    %v156 = vmul.f32 %v150, %v138
    %v157 = vadd.f32 %v155, 4536.0
    %v158 = vadd.f32 %v156, 4536.0
    %v159 = vmul.f32 %v153, %v137
    %v160 = vmul.f32 %v154, %v138
    %v161 = vadd.f32 %v159, 228235.22
    %v162 = vadd.f32 %v160, 228235.22
    %v163 = vmul.f32 %v157, %v137
    %v164 = vmul.f32 %v158, %v138
    %v165 = vadd.f32 %v163, 22449.0
    %v166 = vadd.f32 %v164, 22449.0
    %v167 = vmul.f32 %v161, %v137
    %v168 = vmul.f32 %v162, %v138
    %v169 = vadd.f32 %v167, 1379496.3
    %v170 = vadd.f32 %v168, 1379496.3
    %v171 = vmul.f32 %v165, %v137
    %v172 = vmul.f32 %v166, %v138
    %v173 = vadd.f32 %v171, 67284.0
    %v174 = vadd.f32 %v172, 67284.0
    %v175 = vmul.f32 %v169, %v137
    %v176 = vmul.f32 %v170, %v138
    %v177 = vadd.f32 %v175, 5210869.0
    %v178 = vadd.f32 %v176, 5210869.0
    %v179 = vmul.f32 %v173, %v137
    %v180 = vmul.f32 %v174, %v138
    %v181 = vadd.f32 %v179, 118124.0
    %v182 = vadd.f32 %v180, 118124.0
    %v183 = vmul.f32 %v177, %v137
    %v184 = vmul.f32 %v178, %v138
    %v185 = vadd.f32 %v183, 11246929.0
    %v186 = vadd.f32 %v184, 11246929.0
    %v187 = vmul.f32 %v181, %v137
    %v188 = vmul.f32 %v182, %v138
    %v189 = vadd.f32 %v187, 109584.0
    %v190 = vadd.f32 %v188, 109584.0
    %v191 = vmul.f32 %v185, %v137
    %v192 = vmul.f32 %v186, %v138
    %v193 = vadd.f32 %v191, 10619610.0
    %v194 = vadd.f32 %v192, 10619610.0
    %v195 = vmul.f32 %v189, %v137
    %v196 = vmul.f32 %v190, %v138
    %v197 = vadd.f32 %v195, 40320.0
    %v198 = vadd.f32 %v196, 40320.0
    %v199 = vrcp.pop %v197
    %v200 = vmul.f32 %v193, %v199
    %v201 = vrcp.pop %v198
    %v202 = vmul.f32 %v194, %v201
    %v203 = vadd.f32 %v137, 7.0
    %v204 = vadd.f32 %v138, 7.0
    %v205 = vadd.f32 %v203, 0.5
    %v206 = vadd.f32 %v204, 0.5
    %v207 = vadd.f32 %v137, 0.5
    %v208 = vadd.f32 %v138, 0.5
    %v209 = vlog2.pop %v205
    %v210 = vmul.f32 %v209, 0.6931472
    %v211 = vlog2.pop %v206
    %v212 = vmul.f32 %v211, 0.6931472
    %v213 = vmul.f32 %v207, %v210
    %v214 = vmul.f32 %v208, %v212
    %v215 = vadd.f32 %v213, 0.9189385
    %v216 = vadd.f32 %v214, 0.9189385
    %v217 = vsub.f32 %v215, %v205
    %v218 = vsub.f32 %v216, %v206
    %v219 = vlog2.pop %v200
    %v220 = vmul.f32 %v219, 0.6931472
    %v221 = vlog2.pop %v202
    %v222 = vmul.f32 %v221, 0.6931472
    %v223 = vadd.f32 %v217, %v220
    %v224 = vadd.f32 %v218, %v222
    %p225 = scmp.eq.s32.totalorder 0, 0
    // Predicated region
    $region82: #{tpu_custom_call.1} parent=1 // pred_check
      %p226 = pneg %p225
    $region83: #{tpu_custom_call.1} parent=1 // pred_check_branch
      %228 = sbr.rel (%p226) target = $region85
    $region84: #{tpu_custom_call.1} parent=1 // pred_region
      %229 = vst [vmem:[#allocation2] sm:$0xff] 0.0
    $region85: #{tpu_custom_call.1} parent=1 // pred_fallthru
      _
    %v230 = vsub.f32 0.0, %v129
    %v231 = vsub.f32 0.0, %v130
    %v232 = vmax.f32 %v230, 0.0
    %v233 = vmax.f32 %v231, 0.0
    %v234 = vand.u32 2147483647, %v230
    %v235 = vand.u32 2147483647, %v231
    %v236 = vsub.f32 0.0, %v234
    %v237 = vsub.f32 0.0, %v235
    %v238 = vmul.f32 %v236, 1.442695
    %v239 = vpow.pop %v238
    %v240 = vmul.f32 %v237, 1.442695
    %v241 = vpow.pop %v240
    %v242 = vadd.f32 %v239, 1.0
    %v243 = vadd.f32 %v241, 1.0
    %v244 = vlog2.pop %v242
    %v245 = vmul.f32 %v244, 0.6931472
    %v246 = vlog2.pop %v243
    %v247 = vmul.f32 %v246, 0.6931472
    %v248 = vadd.f32 %v232, %v245
    %v249 = vadd.f32 %v233, %v247
    %v250 = vadd.f32 %v123, %v127
    %v251 = vadd.f32 %v124, %v128
    %v252 = vadd.f32 %v250, 1e-08
    %v253 = vadd.f32 %v251, 1e-08
    %v254 = vlog2.pop %v252
    %v255 = vmul.f32 %v254, 0.6931472
    %v256 = vlog2.pop %v253
    %v257 = vmul.f32 %v256, 0.6931472
    %v258 = vsub.f32 %v134, %v255
    %v259 = vsub.f32 %v136, %v257
    %v260 = vmul.f32 %v123, %v258
    %v261 = vmul.f32 %v124, %v259
    %v262 = vadd.f32 %v230, %v260
    %v263 = vadd.f32 %v231, %v261
    %v264 = vmax.f32 %v262, 0.0
    %v265 = vmax.f32 %v263, 0.0
    %v266 = vand.u32 2147483647, %v262
    %v267 = vand.u32 2147483647, %v263
    %v268 = vsub.f32 0.0, %v266
    %v269 = vsub.f32 0.0, %v267
    %v270 = vmul.f32 %v268, 1.442695
    %v271 = vpow.pop %v270
    %v272 = vmul.f32 %v269, 1.442695
    %v273 = vpow.pop %v272
    %v274 = vadd.f32 %v271, 1.0
    %v275 = vadd.f32 %v273, 1.0
    %v276 = vlog2.pop %v274
    %v277 = vmul.f32 %v276, 0.6931472
    %v278 = vlog2.pop %v275
    %v279 = vmul.f32 %v278, 0.6931472
    %v280 = vadd.f32 %v264, %v277
    %v281 = vadd.f32 %v265, %v279
    %v282 = vsub.f32 %v280, %v248
    %v283 = vsub.f32 %v281, %v249
    %v284 = vsub.f32 0.0, %v248
    %v285 = vsub.f32 0.0, %v249
    %v286 = vadd.f32 %v284, %v262
    %v287 = vadd.f32 %v285, %v263
    %v288 = vadd.f32 %v127, 1e-08
    %v289 = vadd.f32 %v128, 1e-08
    %v290 = vlog2.pop %v288
    %v291 = vmul.f32 %v290, 0.6931472
    %v292 = vlog2.pop %v289
    %v293 = vmul.f32 %v292, 0.6931472
    %v294 = vsub.f32 %v291, %v255
    %v295 = vsub.f32 %v293, %v257
    %v296 = vmul.f32 %v125, %v294
    %v297 = vmul.f32 %v126, %v295
    %v298 = vadd.f32 %v286, %v296
    %v299 = vadd.f32 %v287, %v297
    %v300 = vadd.f32 %v125, %v123
    %v301 = vadd.f32 %v126, %v124
    %v302 = vsub.f32 %v300, 1.0
    %v303 = vsub.f32 %v301, 1.0
    %v304 = vadd.f32 %v302, 60.458332
    %v305 = vadd.f32 %v303, 60.458332
    %v306 = vadd.f32 %v302, 36.0
    %v307 = vadd.f32 %v303, 36.0
    %v308 = vmul.f32 %v304, %v302
    %v309 = vmul.f32 %v305, %v303
    %v310 = vadd.f32 %v308, 1599.0425
    %v311 = vadd.f32 %v309, 1599.0425
    %v312 = vmul.f32 %v306, %v302
    %v313 = vmul.f32 %v307, %v303
    %v314 = vadd.f32 %v312, 546.0
    %v315 = vadd.f32 %v313, 546.0
    %v316 = vmul.f32 %v310, %v302
    %v317 = vmul.f32 %v311, %v303
    %v318 = vadd.f32 %v316, 24165.51
    %v319 = vadd.f32 %v317, 24165.51
    %v320 = vmul.f32 %v314, %v302
    %v321 = vmul.f32 %v315, %v303
    %v322 = vadd.f32 %v320, 4536.0
    %v323 = vadd.f32 %v321, 4536.0
    %v324 = vmul.f32 %v318, %v302
    %v325 = vmul.f32 %v319, %v303
    %v326 = vadd.f32 %v324, 228235.22
    %v327 = vadd.f32 %v325, 228235.22
    %v328 = vmul.f32 %v322, %v302
    %v329 = vmul.f32 %v323, %v303
    %v330 = vadd.f32 %v328, 22449.0
    %v331 = vadd.f32 %v329, 22449.0
    %v332 = vmul.f32 %v326, %v302
    %v333 = vmul.f32 %v327, %v303
    %v334 = vadd.f32 %v332, 1379496.3
    %v335 = vadd.f32 %v333, 1379496.3
    %v336 = vmul.f32 %v330, %v302
    %v337 = vmul.f32 %v331, %v303
    %v338 = vadd.f32 %v336, 67284.0
    %v339 = vadd.f32 %v337, 67284.0
    %v340 = vmul.f32 %v334, %v302
    %v341 = vmul.f32 %v335, %v303
    %v342 = vadd.f32 %v340, 5210869.0
    %v343 = vadd.f32 %v341, 5210869.0
    %v344 = vmul.f32 %v338, %v302
    %v345 = vmul.f32 %v339, %v303
    %v346 = vadd.f32 %v344, 118124.0
    %v347 = vadd.f32 %v345, 118124.0
    %v348 = vmul.f32 %v342, %v302
    %v349 = vmul.f32 %v343, %v303
    %v350 = vadd.f32 %v348, 11246929.0
    %v351 = vadd.f32 %v349, 11246929.0
    %v352 = vmul.f32 %v346, %v302
    %v353 = vmul.f32 %v347, %v303
    %v354 = vadd.f32 %v352, 109584.0
    %v355 = vadd.f32 %v353, 109584.0
    %v356 = vmul.f32 %v350, %v302
    %v357 = vmul.f32 %v351, %v303
    %v358 = vadd.f32 %v356, 10619610.0
    %v359 = vadd.f32 %v357, 10619610.0
    %v360 = vmul.f32 %v354, %v302
    %v361 = vmul.f32 %v355, %v303
    %v362 = vadd.f32 %v360, 40320.0
    %v363 = vadd.f32 %v361, 40320.0
    %v364 = vrcp.pop %v362
    %v365 = vmul.f32 %v358, %v364
    %v366 = vrcp.pop %v363
    %v367 = vmul.f32 %v359, %v366
    %v368 = vadd.f32 %v302, 7.0
    %v369 = vadd.f32 %v303, 7.0
    %v370 = vadd.f32 %v368, 0.5
    %v371 = vadd.f32 %v369, 0.5
    %v372 = vadd.f32 %v302, 0.5
    %v373 = vadd.f32 %v303, 0.5
    %v374 = vlog2.pop %v370
    %v375 = vmul.f32 %v374, 0.6931472
    %v376 = vlog2.pop %v371
    %v377 = vmul.f32 %v376, 0.6931472
    %v378 = vmul.f32 %v372, %v375
    %v379 = vmul.f32 %v373, %v377
    %v380 = vadd.f32 %v378, 0.9189385
    %v381 = vadd.f32 %v379, 0.9189385
    %v382 = vsub.f32 %v380, %v370
    %v383 = vsub.f32 %v381, %v371
    %v384 = vlog2.pop %v365
    %v385 = vmul.f32 %v384, 0.6931472
    %v386 = vlog2.pop %v367
    %v387 = vmul.f32 %v386, 0.6931472
    %v388 = vadd.f32 %v382, %v385
    %v389 = vadd.f32 %v383, %v387
    %v390 = vadd.f32 %v298, %v388
    %v391 = vadd.f32 %v299, %v389
    %v392 = vsub.f32 %v390, %v223
    %v393 = vsub.f32 %v391, %v224
    %v394 = vadd.f32 %v125, 1.0
    %v395 = vadd.f32 %v126, 1.0
    %v396 = vsub.f32 %v394, 1.0
    %v397 = vsub.f32 %v395, 1.0
    %v398 = vadd.f32 %v396, 60.458332
    %v399 = vadd.f32 %v397, 60.458332
    %v400 = vadd.f32 %v396, 36.0
    %v401 = vadd.f32 %v397, 36.0
    %v402 = vmul.f32 %v398, %v396
    %v403 = vmul.f32 %v399, %v397
    %v404 = vadd.f32 %v402, 1599.0425
    %v405 = vadd.f32 %v403, 1599.0425
    %v406 = vmul.f32 %v400, %v396
    %v407 = vmul.f32 %v401, %v397
    %v408 = vadd.f32 %v406, 546.0
    %v409 = vadd.f32 %v407, 546.0
    %v410 = vmul.f32 %v404, %v396
    %v411 = vmul.f32 %v405, %v397
    %v412 = vadd.f32 %v410, 24165.51
    %v413 = vadd.f32 %v411, 24165.51
    %v414 = vmul.f32 %v408, %v396
    %v415 = vmul.f32 %v409, %v397
    %v416 = vadd.f32 %v414, 4536.0
    %v417 = vadd.f32 %v415, 4536.0
    %v418 = vmul.f32 %v412, %v396
    %v419 = vmul.f32 %v413, %v397
    %v420 = vadd.f32 %v418, 228235.22
    %v421 = vadd.f32 %v419, 228235.22
    %v422 = vmul.f32 %v416, %v396
    %v423 = vmul.f32 %v417, %v397
    %v424 = vadd.f32 %v422, 22449.0
    %v425 = vadd.f32 %v423, 22449.0
    %v426 = vmul.f32 %v420, %v396
    %v427 = vmul.f32 %v421, %v397
    %v428 = vadd.f32 %v426, 1379496.3
    %v429 = vadd.f32 %v427, 1379496.3
    %v430 = vmul.f32 %v424, %v396
    %v431 = vmul.f32 %v425, %v397
    %v432 = vadd.f32 %v430, 67284.0
    %v433 = vadd.f32 %v431, 67284.0
    %v434 = vmul.f32 %v428, %v396
    %v435 = vmul.f32 %v429, %v397
    %v436 = vadd.f32 %v434, 5210869.0
    %v437 = vadd.f32 %v435, 5210869.0
    %v438 = vmul.f32 %v432, %v396
    %v439 = vmul.f32 %v433, %v397
    %v440 = vadd.f32 %v438, 118124.0
    %v441 = vadd.f32 %v439, 118124.0
    %v442 = vmul.f32 %v436, %v396
    %v443 = vmul.f32 %v437, %v397
    %v444 = vadd.f32 %v442, 11246929.0
    %v445 = vadd.f32 %v443, 11246929.0
    %v446 = vmul.f32 %v440, %v396
    %v447 = vmul.f32 %v441, %v397
    %v448 = vadd.f32 %v446, 109584.0
    %v449 = vadd.f32 %v447, 109584.0
    %v450 = vmul.f32 %v444, %v396
    %v451 = vmul.f32 %v445, %v397
    %v452 = vadd.f32 %v450, 10619610.0
    %v453 = vadd.f32 %v451, 10619610.0
    %v454 = vmul.f32 %v448, %v396
    %v455 = vmul.f32 %v449, %v397
    %v456 = vadd.f32 %v454, 40320.0
    %v457 = vadd.f32 %v455, 40320.0
    %v458 = vrcp.pop %v456
    %v459 = vmul.f32 %v452, %v458
    %v460 = vrcp.pop %v457
    %v461 = vmul.f32 %v453, %v460
    %v462 = vadd.f32 %v396, 7.0
    %v463 = vadd.f32 %v397, 7.0
    %v464 = vadd.f32 %v462, 0.5
    %v465 = vadd.f32 %v463, 0.5
    %v466 = vadd.f32 %v396, 0.5
    %v467 = vadd.f32 %v397, 0.5
    %v468 = vlog2.pop %v464
    %v469 = vmul.f32 %v468, 0.6931472
    %v470 = vlog2.pop %v465
    %v471 = vmul.f32 %v470, 0.6931472
    %v472 = vmul.f32 %v466, %v469
    %v473 = vmul.f32 %v467, %v471
    %v474 = vadd.f32 %v472, 0.9189385
    %v475 = vadd.f32 %v473, 0.9189385
    %v476 = vsub.f32 %v474, %v464
    %v477 = vsub.f32 %v475, %v465
    %v478 = vlog2.pop %v459
    %v479 = vmul.f32 %v478, 0.6931472
    %v480 = vlog2.pop %v461
    %v481 = vmul.f32 %v480, 0.6931472
    %v482 = vadd.f32 %v476, %v479
    %v483 = vadd.f32 %v477, %v481
    %v484 = vsub.f32 %v392, %v482
    %v485 = vsub.f32 %v393, %v483
    %vm486 = vcmp.lt.f32.partialorder %v125, 1e-08
    %vm487 = vcmp.lt.f32.partialorder %v126, 1e-08
    %v488 = vsel %vm486, %v282, 0.0
    %v489 = vsel %vm487, %v283, 0.0
    %vm490 = vcmp.gt.f32.partialorder %v125, 1e-08
    %vm491 = vcmp.gt.f32.partialorder %v126, 1e-08
    %v492 = vsel %vm490, %v484, 0.0
    %v493 = vsel %vm491, %v485, 0.0
    %v494 = vadd.f32 %v488, %v492
    %v495 = vadd.f32 %v489, %v493
    %v496 = vadd.f32 %v494, %v495
    %v497 = vld [vmem:[#allocation2] sm:$0xff]
    %v498 = vadd.f32 %v497, %v496
    %499 = vst [vmem:[#allocation2] sm:$0xff] %v498
    // Predicated region
    $region86: #{tpu_custom_call.1} parent=1 // pred_check
      %p500 = pneg %p225
    $region87: #{tpu_custom_call.1} parent=1 // pred_check_branch
      %502 = sbr.rel (%p500) target = $region89
    $region88: #{tpu_custom_call.1} parent=1 // pred_region
      %v503 = vld [vmem:[#allocation2] sm:$0xff]
      %504 = vadd.xlane.f32.xlu0 %v503
      %v505 = vpop.xlane.xlu0 %504
      %v506 = vsub.f32 0.0, %v505
      %v507 = vld [vmem:[%s6] sm:$0xff]
      %v508 = vld [vmem:[%s7] sm:$0xff]
      %v509 = vld [vmem:[%s8] sm:$0xff]
      %v510 = vld [vmem:[%s9] sm:$0xff]
      %v511 = vrcp.pop %v508
      %v512 = vmul.f32 %v510, %v511
      %v513 = vlog2.pop %v512
      %v514 = vmul.f32 %v513, 0.6931472
      %v515 = vmul.f32 %v514, 0.5
      %v516 = vsub.f32 %v507, %v509
      %v517 = vmul.f32 %v516, %v516
      %v518 = vadd.f32 %v508, %v517
      %v519 = vmul.f32 %v510, 2.0
      %v520 = vrcp.pop %v519
      %v521 = vmul.f32 %v518, %v520
      %v522 = vadd.f32 %v515, %v521
      %v523 = vsub.f32 %v522, 0.5
      %v524 = vadd.f32 %v523, 0.0
      %v525 = vadd.f32 %v506, %v524
      %vm526 = vcmask 7168
      %527 = vst.msk [vmem:[%s14] sm:$0xff] %vm526, %v525
      %v528 = vld [vmem:[#allocation7] sm:$0xff]
      %v529 = vld [vmem:[#allocation8] sm:$0xff]
      %v530 = vmul.f32 %v528, %v528
      %v531 = vadd.f32 %v529, %v530
      %v532 = vlog2.pop %v529
      %v533 = vmul.f32 %v532, 0.6931472
      %v534 = vsub.f32 %v531, %v533
      %v535 = vsub.f32 %v534, 1.0
      %v536 = vmul.f32 %v535, 0.5
      %vm537 = vcmask 261120
      %v538 = vsel %vm537, %v536, 0.0
      %539 = vadd.xlane.f32.xlu0 %v538
      %v540 = vpop.xlane.xlu0 %539
      %541 = vst.msk [vmem:[%s15] sm:$0xff] %vm526, %v540
      %v542 = vld [vmem:[#allocation10] sm:$0xff]
      %vm543 = vcmask 80896
      %v544 = vsel %vm543, %v542, -inf
      %545 = vmax.xlane.f32.xlu0 %v544
      %v546 = vpop.xlane.xlu0 %545
      %v547 = vsub.f32 %v542, %v546
      %v548 = vmul.f32 %v547, 1.442695
      %v549 = vpow.pop %v548
      %v550 = vsel %vm543, %v549, 0.0
      %551 = vadd.xlane.f32.xlu0 %v550
      %v552 = vpop.xlane.xlu0 %551
      %v553 = vlog2.pop %v552
      %v554 = vmul.f32 %v553, 0.6931472
      %v555 = vld [vmem:[%s11] sm:$0xff]
      %v556 = vsub.f32 %v547, %v554
      %v557 = vmul.f32 %v555, %v556
      %v558 = vsel %vm543, %v557, 0.0
      %559 = vadd.xlane.f32.xlu0 %v558
      %v560 = vpop.xlane.xlu0 %559
      %v561 = vsub.f32 0.0, %v560
      %562 = vst.msk [vmem:[%s16] sm:$0xff] %vm526, %v561
      %v563 = vld [vmem:[%s12] sm:$0xff]
      %v564 = vsub.f32 %v528, %v563
      %v565 = vadd.f32 %v564, 1e-06
      %v566 = vmul.f32 %v565, %v565
      %v567 = vsel %vm537, %v566, 0.0
      %568 = vadd.xlane.f32.xlu0 %v567
      %v569 = vpop.xlane.xlu0 %568
      %v570 = vrsqrt.pop %v569
      %v571 = vmul.f32 %v569, %v570
      %vm572 = vcmp.eq.f32.partialorder %v569, inf
      %v573 = vsel %vm572, %v569, %v571
      %vm574 = vcmp.eq.f32.partialorder %v569, 0.0
      %v575 = vand.u32 %v569, 2147483648
      %v576 = vsel %vm574, %v575, %v573
      %v577 = vld [vmem:[#allocation11] sm:$0xff]
      %v578 = vsub.f32 %v528, %v577
      %v579 = vadd.f32 %v578, 1e-06
      %v580 = vmul.f32 %v579, %v579
      %v581 = vsel %vm537, %v580, 0.0
      %582 = vadd.xlane.f32.xlu0 %v581
      %v583 = vpop.xlane.xlu0 %582
      %v584 = vrsqrt.pop %v583
      %v585 = vmul.f32 %v583, %v584
      %vm586 = vcmp.eq.f32.partialorder %v583, inf
      %v587 = vsel %vm586, %v583, %v585
      %vm588 = vcmp.eq.f32.partialorder %v583, 0.0
      %v589 = vand.u32 %v583, 2147483648
      %v590 = vsel %vm588, %v589, %v587
      %v591 = vsub.f32 %v576, %v590
      %v592 = vadd.f32 %v591, 1.0
      %v593 = vmax.f32 %v592, 0.0
      %v594 = vadd.f32 %v593, 0.0
      %s595 = scalar_lea.vmem %s12, 8
      %v596 = vld [vmem:[%s595] sm:$0xff]
      %v597 = vsub.f32 %v528, %v596
      %v598 = vadd.f32 %v597, 1e-06
      %v599 = vmul.f32 %v598, %v598
      %v600 = vsel %vm537, %v599, 0.0
      %601 = vadd.xlane.f32.xlu0 %v600
      %v602 = vpop.xlane.xlu0 %601
      %v603 = vrsqrt.pop %v602
      %v604 = vmul.f32 %v602, %v603
      %vm605 = vcmp.eq.f32.partialorder %v602, inf
      %v606 = vsel %vm605, %v602, %v604
      %vm607 = vcmp.eq.f32.partialorder %v602, 0.0
      %v608 = vand.u32 %v602, 2147483648
      %v609 = vsel %vm607, %v608, %v606
      %s610 = scalar_lea.vmem [#allocation11], 8
      %v611 = vld [vmem:[%s610] sm:$0xff]
      %v612 = vsub.f32 %v528, %v611
      %v613 = vadd.f32 %v612, 1e-06
      %v614 = vmul.f32 %v613, %v613
      %v615 = vsel %vm537, %v614, 0.0
      %616 = vadd.xlane.f32.xlu0 %v615
      %v617 = vpop.xlane.xlu0 %616
      %v618 = vrsqrt.pop %v617
      %v619 = vmul.f32 %v617, %v618
      %vm620 = vcmp.eq.f32.partialorder %v617, inf
      %v621 = vsel %vm620, %v617, %v619
      %vm622 = vcmp.eq.f32.partialorder %v617, 0.0
      %v623 = vand.u32 %v617, 2147483648
      %v624 = vsel %vm622, %v623, %v621
      %v625 = vsub.f32 %v609, %v624
      %v626 = vadd.f32 %v625, 1.0
      %v627 = vmax.f32 %v626, 0.0
      %v628 = vadd.f32 %v594, %v627
      %629 = vst.msk [vmem:[%s17] sm:$0xff] %vm526, %v628
    $region89: #{tpu_custom_call.1} parent=1 // pred_fallthru
      _
    // Predicated region
    $region90: #{tpu_custom_call.1} parent=1 // pred_check
      _
    $region91: #{tpu_custom_call.1} parent=1 // pred_check_branch
      %631 = sbr.rel (0) target = $region93
    $region92: #{tpu_custom_call.1} parent=1 // pred_region
      _
    $region93: #{tpu_custom_call.1} parent=1 // pred_fallthru
      _
    // Predicated region
    $region94: #{tpu_custom_call.1} parent=1 // pred_check
      _
    $region95: #{tpu_custom_call.1} parent=1 // pred_check_branch
      %633 = sbr.rel (0) target = $region97
    $region96: #{tpu_custom_call.1} parent=1 // pred_region
      _
    $region97: #{tpu_custom_call.1} parent=1 // pred_fallthru
      _
    // Predicated region
    $region98: #{tpu_custom_call.1} parent=1 // pred_check
      _
    $region99: #{tpu_custom_call.1} parent=1 // pred_check_branch
      %635 = sbr.rel (0) target = $region101
    $region100: #{tpu_custom_call.1} parent=1 // pred_region
      _
    $region101: #{tpu_custom_call.1} parent=1 // pred_fallthru
      _
    // Predicated region
    $region102: #{tpu_custom_call.1} parent=1 // pred_check
      _
    $region103: #{tpu_custom_call.1} parent=1 // pred_check_branch
      %637 = sbr.rel (0) target = $region105
    $region104: #{tpu_custom_call.1} parent=1 // pred_region
      _
    $region105: #{tpu_custom_call.1} parent=1 // pred_fallthru
      _
    // Predicated region
    $region106: #{tpu_custom_call.1} parent=1 // pred_check
      _
    $region107: #{tpu_custom_call.1} parent=1 // pred_check_branch
      %639 = sbr.rel (0) target = $region109
    $region108: #{tpu_custom_call.1} parent=1 // pred_region
      _
    $region109: #{tpu_custom_call.1} parent=1 // pred_fallthru
      _
    // Predicated region
    $region110: #{tpu_custom_call.1} parent=1 // pred_check
      _
    $region111: #{tpu_custom_call.1} parent=1 // pred_check_branch
      %641 = sbr.rel (0) target = $region113
    $region112: #{tpu_custom_call.1} parent=1 // pred_region
      _
    $region113: #{tpu_custom_call.1} parent=1 // pred_fallthru
      _
    // Predicated region
    $region114: #{tpu_custom_call.1} parent=1 // pred_check
      _
    $region115: #{tpu_custom_call.1} parent=1 // pred_check_branch
      %643 = sbr.rel (0) target = $region117
    $region116: #{tpu_custom_call.1} parent=1 // pred_region
      _
    $region117: #{tpu_custom_call.1} parent=1 // pred_fallthru
      _
    // Predicated region
    $region118: #{tpu_custom_call.1} parent=1 // pred_check
      _
    $region119: #{tpu_custom_call.1} parent=1 // pred_check_branch
      %645 = sbr.rel (0) target = $region121
    $region120: #{tpu_custom_call.1} parent=1 // pred_region
      _
    $region121: #{tpu_custom_call.1} parent=1 // pred_fallthru
      _
    %646 = vsyncpa [#allocation4], 1
    %647 = vsyncpa [#allocation6], 1
    %648 = vsyncpa [#allocation9], 1
    %649 = vsyncpa [#allocation12], 1

</llo_original>
